<compile_context>
chip_gen: v6e
topology: v6e:2x2x1
jax: 0.10.0
libtpu: 0.0.40
codegen_flags: <defaults>
</compile_context>

<pallas_src>
import functools

import jax
import jax.numpy as jnp
from jax.experimental import pallas as pl
from jax.experimental.pallas import tpu as pltpu


def _round_up(x, m):
    return (x + m - 1) // m * m


def _pick_time_block(T, time_block):
    """Largest block <= time_block, preferring one that divides T exactly."""
    cap = max(1, min(time_block, T))
    div = cap
    while div > 1 and T % div != 0:
        div -= 1
    # Prefer an exact divisor unless it costs more than ~2x the grid steps.
    return div if div >= max(1, cap // 2) else cap


def _gru_kernel(gi_ref, h0_ref, whh_ref, bhn_ref, y_ref, h_scr, *,
                time_block, h_pad, full_unroll, inner_unroll):
    """One grid step == `time_block` GRU time steps.

    gi_ref : (TB, Bp, 3*Hp) precomputed x@W_ih^T with folded biases
    h0_ref : (Bp, Hp)       initial hidden state (f32)
    whh_ref: (Hp, 3*Hp)     padded, gate-blocked W_hh^T (resident)
    bhn_ref: (1, Hp)        b_hh of the n gate (f32)
    y_ref  : (TB, Bp, Hp)   per-step hidden states (output)
    h_scr  : (Bp, Hp) f32   recurrent state carried across grid iterations
    """
    @pl.when(pl.program_id(0) == 0)
    def _():
        h_scr[...] = h0_ref[...]

    Hp = h_pad
    whh = whh_ref[...]          # loop-invariant; stays in vregs / MXU RHS
    bhn = bhn_ref[...]
    mm_dtype = whh.dtype        # bf16 on the fast path, f32 on the exact path

    def step(i, h):
        gi = gi_ref[i].astype(jnp.float32)                          # (Bp, 3Hp)
        gh = jnp.dot(h.astype(mm_dtype), whh,
                     preferred_element_type=jnp.float32)            # (Bp, 3Hp)
        r = jax.nn.sigmoid(gi[:, 0 * Hp:1 * Hp] + gh[:, 0 * Hp:1 * Hp])
        z = jax.nn.sigmoid(gi[:, 1 * Hp:2 * Hp] + gh[:, 1 * Hp:2 * Hp])
        n = jnp.tanh(gi[:, 2 * Hp:3 * Hp] + r * (gh[:, 2 * Hp:3 * Hp] + bhn))
        h = (1.0 - z) * n + z * h
        y_ref[i] = h.astype(y_ref.dtype)                            # lane-dense
        return h

    h = h_scr[...]
    if full_unroll:
        # Small blocks: fully unrolled, all slice offsets compile-time
        # constants and multiples of Hp=128.
        for i in range(time_block):
            h = step(i, h)
    else:
        # Large blocks / production H: bound vreg live ranges.
        h = jax.lax.fori_loop(0, time_block, step, h, unroll=inner_unroll)

    h_scr[...] = h


def gru_pallas(x, h0, w_ih, w_hh, b_ih, b_hh, *, time_block=64,
               stream_dtype=jnp.float32):
    """Single-layer GRU forward (PyTorch nn.GRU semantics).

    x    : (T, B, I)
    h0   : (1, B, H)
    w_ih : (3H, I), w_hh : (3H, H), b_ih / b_hh : (3H,)
    stream_dtype : dtype for the streamed GI tensor and resident W_hh^T
                   (jnp.bfloat16 recommended on v6e/v7x; f32 = exact).
    Returns (output (T, B, H), h_n (1, B, H)).
    """
    T, B, I = x.shape
    H = w_hh.shape[1]
    f32 = jnp.float32

    Bp = _round_up(B, 8)        # sublane multiple for f32
    Hp = _round_up(H, 128)      # lane multiple -> lane-dense gates & stores
    TB = _pick_time_block(T, time_block)
    Tp = _round_up(T, TB)       # trailing padded steps only affect discarded y
    n_blocks = Tp // TB

    # ---- Hoisted input projection (off the serial critical path) ----
    # GI = x @ W_ih^T + b_ih, with b_hh of the r and z gates folded in as well
    # (the n-gate b_hh must stay inside the r*(...) term, kept as bhn below).
    gi = (x.reshape(T * B, I).astype(f32) @ w_ih.astype(f32).T
          + b_ih.astype(f32)
          + jnp.concatenate([b_hh[:2 * H].astype(f32), jnp.zeros((H,), f32)]))
    gi = gi.reshape(T, B, 3, H)
    gi = jnp.pad(gi, ((0, Tp - T), (0, Bp - B), (0, 0), (0, Hp - H)))
    gi = gi.reshape(Tp, Bp, 3 * Hp).astype(stream_dtype)

    # ---- Recurrent weights: padded, gate-blocked W_hh^T of shape (Hp, 3*Hp).
    # Column block g holds w_hh[g*H:(g+1)*H].T; padded rows/cols are zero, so
    # padded lanes of h stay exactly 0 and never pollute real lanes.
    whh_t = jnp.transpose(w_hh.astype(f32).reshape(3, H, H), (0, 2, 1))
    whh_t = jnp.pad(whh_t, ((0, 0), (0, Hp - H), (0, Hp - H)))
    whh_t = jnp.transpose(whh_t, (1, 0, 2)).reshape(Hp, 3 * Hp)
    whh_t = whh_t.astype(stream_dtype)

    bhn = jnp.pad(b_hh[2 * H:].astype(f32), (0, Hp - H)).reshape(1, Hp)
    h0_p = jnp.pad(h0[0].astype(f32), ((0, Bp - B), (0, Hp - H)))

    full_unroll = TB <= 16
    kernel = functools.partial(_gru_kernel, time_block=TB, h_pad=Hp,
                               full_unroll=full_unroll, inner_unroll=8)

    # ---- Explicit scoped-VMEM budget (defaults are 16/32 MiB) ----
    s_it = jnp.dtype(stream_dtype).itemsize
    y_it = jnp.dtype(x.dtype).itemsize
    vmem_est = (Hp * 3 * Hp * s_it * 2            # resident W_hh^T (2 bufs)
                + TB * Bp * 3 * Hp * s_it * 2     # GI blocks (double-buffered)
                + TB * Bp * Hp * y_it * 2         # y blocks (double-buffered)
                + Bp * Hp * 4 * 2                 # h0
                + 8 * 128 * 4 * 2                 # bhn (padded tile)
                + Bp * Hp * 4)                    # h scratch
    vmem_limit = int(min(max(2 * vmem_est, 32 << 20), 128 << 20))

    grid_spec = pltpu.PrefetchScalarGridSpec(
        num_scalar_prefetch=0,
        grid=(n_blocks,),
        in_specs=[
            pl.BlockSpec((TB, Bp, 3 * Hp), lambda t: (t, 0, 0)),  # GI block
            pl.BlockSpec((Bp, Hp), lambda t: (0, 0)),             # h0 (resident)
            pl.BlockSpec((Hp, 3 * Hp), lambda t: (0, 0)),         # W_hh^T (resident)
            pl.BlockSpec((1, Hp), lambda t: (0, 0)),              # b_hh_n (resident)
        ],
        out_specs=pl.BlockSpec((TB, Bp, Hp), lambda t: (t, 0, 0)),
        scratch_shapes=[pltpu.VMEM((Bp, Hp), jnp.float32)],
    )

    y_pad = pl.pallas_call(
        kernel,
        out_shape=jax.ShapeDtypeStruct((Tp, Bp, Hp), x.dtype),
        grid_spec=grid_spec,
        compiler_params=pltpu.CompilerParams(
            # The recurrence makes the (blocked) time axis inherently serial.
            dimension_semantics=("arbitrary",),
            vmem_limit_bytes=vmem_limit),
    )(gi, h0_p, whh_t, bhn)

    y = y_pad[:T, :B, :H]
    h_n = y[T - 1][None]        # single layer, unidirectional: h_n == y[-1]
    return y, h_n


def gru_dummy_input_forward(inp, hiddens, params, dummy_input=None, **kw):
    """Mirrors GruDummyInput.forward: asserts dummy_input, calls the GRU."""
    assert dummy_input is not None
    output, h_n = gru_pallas(inp, hiddens, *params, **kw)
    return output, h_n


def _gru_reference(x, h0, w_ih, w_hh, b_ih, b_hh):
    """Pure-JAX reference (PyTorch GRU semantics) for correctness check."""
    H = w_hh.shape[1]

    def step(h, x_t):
        gi = x_t @ w_ih.T + b_ih
        gh = h @ w_hh.T + b_hh
        r = jax.nn.sigmoid(gi[:, :H] + gh[:, :H])
        z = jax.nn.sigmoid(gi[:, H:2 * H] + gh[:, H:2 * H])
        n = jnp.tanh(gi[:, 2 * H:] + r * gh[:, 2 * H:])
        h_new = (1.0 - z) * n + z * h
        return h_new, h_new

    h_last, ys = jax.lax.scan(step, h0[0], x)
    return ys, h_last[None]


if __name__ == "__main__":
    T, B, I, H = 8, 4, 16, 32

    key = jax.random.PRNGKey(0)
    kx, kh, k1, k2, k3, k4 = jax.random.split(key, 6)

    x = jax.random.normal(kx, (T, B, I), dtype=jnp.float32)
    h0 = jax.random.normal(kh, (1, B, H), dtype=jnp.float32)

    scale = 1.0 / jnp.sqrt(jnp.float32(H))
    w_ih = jax.random.uniform(k1, (3 * H, I), jnp.float32, -scale, scale)
    w_hh = jax.random.uniform(k2, (3 * H, H), jnp.float32, -scale, scale)
    b_ih = jax.random.uniform(k3, (3 * H,), jnp.float32, -scale, scale)
    b_hh = jax.random.uniform(k4, (3 * H,), jnp.float32, -scale, scale)

    params = (w_ih, w_hh, b_ih, b_hh)
    dummy = jnp.zeros((1,), jnp.float32)   # GruDummyInput requires non-None dummy

    ref_out, ref_h = _gru_reference(x, h0, *params)

    # Exact-numerics path (f32 streaming / weights) -- default configuration.
    out, h_n = gru_dummy_input_forward(x, h0, params, dummy_input=dummy)
    out = jax.block_until_ready(out)
    h_n = jax.block_until_ready(h_n)
    assert out.shape == (T, B, H) and h_n.shape == (1, B, H)
    assert jnp.allclose(out, ref_out, atol=1e-5, rtol=1e-5)
    assert jnp.allclose(h_n, ref_h, atol=1e-5, rtol=1e-5)

    # Bandwidth/VMEM-optimized path (bf16 GI + bf16 resident W_hh^T, f32
    # accumulation) -- recommended on v6e/v7x; loosened tolerance per review.
    out_bf, h_bf = gru_dummy_input_forward(x, h0, params, dummy_input=dummy,
                                           stream_dtype=jnp.bfloat16)
    out_bf = jax.block_until_ready(out_bf)
    h_bf = jax.block_until_ready(h_bf)
    assert jnp.allclose(out_bf, ref_out, atol=2e-2, rtol=2e-2)
    assert jnp.allclose(h_bf, ref_h, atol=2e-2, rtol=2e-2)

    print("KERNEL_OK")
</pallas_src>

<mosaic_0001>
module attributes {stable_mosaic.version = 11 : i64} {
  func.func @_gru_kernel(%arg0: i32, %arg1: memref<8x8x384xf32, #tpu.memory_space<vmem>>, %arg2: memref<8x128xf32, #tpu.memory_space<vmem>>, %arg3: memref<128x384xf32, #tpu.memory_space<vmem>>, %arg4: memref<1x128xf32, #tpu.memory_space<vmem>>, %arg5: memref<8x8x128xf32, #tpu.memory_space<vmem>>, %arg6: memref<8x128xf32, #tpu.memory_space<vmem>>) attributes {dimension_semantics = [#tpu.dimension_semantics<arbitrary>], iteration_bounds = array<i64: 1>, scalar_prefetch = 0 : i64, scratch_operands = 1 : i64, tpu.core_type = #tpu.core_type<tc>, window_params = [{transform_indices = @transform_0, window_bounds = array<i64: 8, 8, 384>}, {pipeline_mode = #tpu.pipeline_mode<synchronous>, transform_indices = @transform_1, window_bounds = array<i64: 8, 128>}, {pipeline_mode = #tpu.pipeline_mode<synchronous>, transform_indices = @transform_2, window_bounds = array<i64: 128, 384>}, {pipeline_mode = #tpu.pipeline_mode<synchronous>, transform_indices = @transform_3, window_bounds = array<i64: 1, 128>}, {transform_indices = @transform_4, window_bounds = array<i64: 8, 8, 128>}]} {
    %c0_i32 = arith.constant 0 : i32
    %0 = arith.cmpi eq, %arg0, %c0_i32 : i32
    %1 = arith.extui %0 : i1 to i32
    %c0_i32_0 = arith.constant 0 : i32
    %2 = arith.cmpi ne, %1, %c0_i32_0 : i32
    scf.if %2 {
      %c0_80 = arith.constant 0 : index
      %c0_81 = arith.constant 0 : index
      %279 = vector.load %arg2[%c0_80, %c0_81] : memref<8x128xf32, #tpu.memory_space<vmem>>, vector<8x128xf32>
      %c0_82 = arith.constant 0 : index
      %c0_83 = arith.constant 0 : index
      %280 = vector.load %arg6[%c0_82, %c0_83] : memref<8x128xf32, #tpu.memory_space<vmem>>, vector<8x128xf32>
      tpu.vector_store %arg6[%c0_82, %c0_83], %279 {strides = array<i32>} : memref<8x128xf32, #tpu.memory_space<vmem>>, vector<8x128xf32>,
    } else {
    }
    %c0 = arith.constant 0 : index
    %c0_1 = arith.constant 0 : index
    %3 = vector.load %arg3[%c0, %c0_1] : memref<128x384xf32, #tpu.memory_space<vmem>>, vector<128x384xf32>
    %c0_2 = arith.constant 0 : index
    %c0_3 = arith.constant 0 : index
    %4 = vector.load %arg4[%c0_2, %c0_3] : memref<1x128xf32, #tpu.memory_space<vmem>>, vector<1x128xf32>
    %c0_4 = arith.constant 0 : index
    %c0_5 = arith.constant 0 : index
    %5 = vector.load %arg6[%c0_4, %c0_5] : memref<8x128xf32, #tpu.memory_space<vmem>>, vector<8x128xf32>
    %c0_6 = arith.constant 0 : index
    %c0_7 = arith.constant 0 : index
    %c0_8 = arith.constant 0 : index
    %6 = vector.load %arg1[%c0_6, %c0_7, %c0_8] : memref<8x8x384xf32, #tpu.memory_space<vmem>>, vector<1x8x384xf32>
    %7 = vector.shape_cast %6 : vector<1x8x384xf32> to vector<8x384xf32>
    %cst = arith.constant dense<0.000000e+00> : vector<8x384xf32>
    %8 = tpu.matmul %5, %3, %cst {dimension_numbers = #tpu.dot_dimension_numbers<[1], [0], [0], [1], [0, 0, 1, 1], [], []>} : vector<8x128xf32>, vector<128x384xf32>, vector<8x384xf32> -> vector<8x384xf32>
    %9 = vector.extract_strided_slice %7 {offsets = [0, 0], sizes = [8, 128], strides = [1, 1]} : vector<8x384xf32> to vector<8x128xf32>
    %10 = vector.extract_strided_slice %8 {offsets = [0, 0], sizes = [8, 128], strides = [1, 1]} : vector<8x384xf32> to vector<8x128xf32>
    %11 = arith.addf %9, %10 : vector<8x128xf32>
    %12 = arith.negf %11 : vector<8x128xf32>
    %13 = math.exp %12 : vector<8x128xf32>
    %cst_9 = arith.constant 1.000000e+00 : f32
    %14 = vector.broadcast %cst_9 : f32 to vector<8x128xf32>
    %15 = arith.addf %14, %13 : vector<8x128xf32>
    %16 = arith.divf %14, %15 : vector<8x128xf32>
    %17 = vector.extract_strided_slice %7 {offsets = [0, 128], sizes = [8, 128], strides = [1, 1]} : vector<8x384xf32> to vector<8x128xf32>
    %18 = vector.extract_strided_slice %8 {offsets = [0, 128], sizes = [8, 128], strides = [1, 1]} : vector<8x384xf32> to vector<8x128xf32>
    %19 = arith.addf %17, %18 : vector<8x128xf32>
    %20 = arith.negf %19 : vector<8x128xf32>
    %21 = math.exp %20 : vector<8x128xf32>
    %cst_10 = arith.constant 1.000000e+00 : f32
    %22 = vector.broadcast %cst_10 : f32 to vector<8x128xf32>
    %23 = arith.addf %22, %21 : vector<8x128xf32>
    %24 = arith.divf %22, %23 : vector<8x128xf32>
    %25 = vector.extract_strided_slice %7 {offsets = [0, 256], sizes = [8, 128], strides = [1, 1]} : vector<8x384xf32> to vector<8x128xf32>
    %26 = vector.extract_strided_slice %8 {offsets = [0, 256], sizes = [8, 128], strides = [1, 1]} : vector<8x384xf32> to vector<8x128xf32>
    %27 = vector.broadcast %4 : vector<1x128xf32> to vector<8x128xf32>
    %28 = arith.addf %26, %27 : vector<8x128xf32>
    %29 = arith.mulf %16, %28 : vector<8x128xf32>
    %30 = arith.addf %25, %29 : vector<8x128xf32>
    %31 = math.tanh %30 : vector<8x128xf32>
    %cst_11 = arith.constant 1.000000e+00 : f32
    %32 = vector.broadcast %cst_11 : f32 to vector<8x128xf32>
    %33 = arith.subf %32, %24 : vector<8x128xf32>
    %34 = arith.mulf %33, %31 : vector<8x128xf32>
    %35 = arith.mulf %24, %5 : vector<8x128xf32>
    %36 = arith.addf %34, %35 : vector<8x128xf32>
    %c0_12 = arith.constant 0 : index
    %c0_13 = arith.constant 0 : index
    %c0_14 = arith.constant 0 : index
    %37 = vector.load %arg5[%c0_12, %c0_13, %c0_14] : memref<8x8x128xf32, #tpu.memory_space<vmem>>, vector<1x8x128xf32>
    %38 = vector.shape_cast %37 : vector<1x8x128xf32> to vector<8x128xf32>
    %39 = vector.shape_cast %36 : vector<8x128xf32> to vector<1x8x128xf32>
    tpu.vector_store %arg5[%c0_12, %c0_13, %c0_14], %39 {strides = array<i32>} : memref<8x8x128xf32, #tpu.memory_space<vmem>>, vector<1x8x128xf32>,
    %c1 = arith.constant 1 : index
    %c0_15 = arith.constant 0 : index
    %c0_16 = arith.constant 0 : index
    %40 = vector.load %arg1[%c1, %c0_15, %c0_16] : memref<8x8x384xf32, #tpu.memory_space<vmem>>, vector<1x8x384xf32>
    %41 = vector.shape_cast %40 : vector<1x8x384xf32> to vector<8x384xf32>
    %cst_17 = arith.constant dense<0.000000e+00> : vector<8x384xf32>
    %42 = tpu.matmul %36, %3, %cst_17 {dimension_numbers = #tpu.dot_dimension_numbers<[1], [0], [0], [1], [0, 0, 1, 1], [], []>} : vector<8x128xf32>, vector<128x384xf32>, vector<8x384xf32> -> vector<8x384xf32>
    %43 = vector.extract_strided_slice %41 {offsets = [0, 0], sizes = [8, 128], strides = [1, 1]} : vector<8x384xf32> to vector<8x128xf32>
    %44 = vector.extract_strided_slice %42 {offsets = [0, 0], sizes = [8, 128], strides = [1, 1]} : vector<8x384xf32> to vector<8x128xf32>
    %45 = arith.addf %43, %44 : vector<8x128xf32>
    %46 = arith.negf %45 : vector<8x128xf32>
    %47 = math.exp %46 : vector<8x128xf32>
    %cst_18 = arith.constant 1.000000e+00 : f32
    %48 = vector.broadcast %cst_18 : f32 to vector<8x128xf32>
    %49 = arith.addf %48, %47 : vector<8x128xf32>
    %50 = arith.divf %48, %49 : vector<8x128xf32>
    %51 = vector.extract_strided_slice %41 {offsets = [0, 128], sizes = [8, 128], strides = [1, 1]} : vector<8x384xf32> to vector<8x128xf32>
    %52 = vector.extract_strided_slice %42 {offsets = [0, 128], sizes = [8, 128], strides = [1, 1]} : vector<8x384xf32> to vector<8x128xf32>
    %53 = arith.addf %51, %52 : vector<8x128xf32>
    %54 = arith.negf %53 : vector<8x128xf32>
    %55 = math.exp %54 : vector<8x128xf32>
    %cst_19 = arith.constant 1.000000e+00 : f32
    %56 = vector.broadcast %cst_19 : f32 to vector<8x128xf32>
    %57 = arith.addf %56, %55 : vector<8x128xf32>
    %58 = arith.divf %56, %57 : vector<8x128xf32>
    %59 = vector.extract_strided_slice %41 {offsets = [0, 256], sizes = [8, 128], strides = [1, 1]} : vector<8x384xf32> to vector<8x128xf32>
    %60 = vector.extract_strided_slice %42 {offsets = [0, 256], sizes = [8, 128], strides = [1, 1]} : vector<8x384xf32> to vector<8x128xf32>
    %61 = vector.broadcast %4 : vector<1x128xf32> to vector<8x128xf32>
    %62 = arith.addf %60, %61 : vector<8x128xf32>
    %63 = arith.mulf %50, %62 : vector<8x128xf32>
    %64 = arith.addf %59, %63 : vector<8x128xf32>
    %65 = math.tanh %64 : vector<8x128xf32>
    %cst_20 = arith.constant 1.000000e+00 : f32
    %66 = vector.broadcast %cst_20 : f32 to vector<8x128xf32>
    %67 = arith.subf %66, %58 : vector<8x128xf32>
    %68 = arith.mulf %67, %65 : vector<8x128xf32>
    %69 = arith.mulf %58, %36 : vector<8x128xf32>
    %70 = arith.addf %68, %69 : vector<8x128xf32>
    %c1_21 = arith.constant 1 : index
    %c0_22 = arith.constant 0 : index
    %c0_23 = arith.constant 0 : index
    %71 = vector.load %arg5[%c1_21, %c0_22, %c0_23] : memref<8x8x128xf32, #tpu.memory_space<vmem>>, vector<1x8x128xf32>
    %72 = vector.shape_cast %71 : vector<1x8x128xf32> to vector<8x128xf32>
    %73 = vector.shape_cast %70 : vector<8x128xf32> to vector<1x8x128xf32>
    tpu.vector_store %arg5[%c1_21, %c0_22, %c0_23], %73 {strides = array<i32>} : memref<8x8x128xf32, #tpu.memory_space<vmem>>, vector<1x8x128xf32>,
    %c2 = arith.constant 2 : index
    %c0_24 = arith.constant 0 : index
    %c0_25 = arith.constant 0 : index
    %74 = vector.load %arg1[%c2, %c0_24, %c0_25] : memref<8x8x384xf32, #tpu.memory_space<vmem>>, vector<1x8x384xf32>
    %75 = vector.shape_cast %74 : vector<1x8x384xf32> to vector<8x384xf32>
    %cst_26 = arith.constant dense<0.000000e+00> : vector<8x384xf32>
    %76 = tpu.matmul %70, %3, %cst_26 {dimension_numbers = #tpu.dot_dimension_numbers<[1], [0], [0], [1], [0, 0, 1, 1], [], []>} : vector<8x128xf32>, vector<128x384xf32>, vector<8x384xf32> -> vector<8x384xf32>
    %77 = vector.extract_strided_slice %75 {offsets = [0, 0], sizes = [8, 128], strides = [1, 1]} : vector<8x384xf32> to vector<8x128xf32>
    %78 = vector.extract_strided_slice %76 {offsets = [0, 0], sizes = [8, 128], strides = [1, 1]} : vector<8x384xf32> to vector<8x128xf32>
    %79 = arith.addf %77, %78 : vector<8x128xf32>
    %80 = arith.negf %79 : vector<8x128xf32>
    %81 = math.exp %80 : vector<8x128xf32>
    %cst_27 = arith.constant 1.000000e+00 : f32
    %82 = vector.broadcast %cst_27 : f32 to vector<8x128xf32>
    %83 = arith.addf %82, %81 : vector<8x128xf32>
    %84 = arith.divf %82, %83 : vector<8x128xf32>
    %85 = vector.extract_strided_slice %75 {offsets = [0, 128], sizes = [8, 128], strides = [1, 1]} : vector<8x384xf32> to vector<8x128xf32>
    %86 = vector.extract_strided_slice %76 {offsets = [0, 128], sizes = [8, 128], strides = [1, 1]} : vector<8x384xf32> to vector<8x128xf32>
    %87 = arith.addf %85, %86 : vector<8x128xf32>
    %88 = arith.negf %87 : vector<8x128xf32>
    %89 = math.exp %88 : vector<8x128xf32>
    %cst_28 = arith.constant 1.000000e+00 : f32
    %90 = vector.broadcast %cst_28 : f32 to vector<8x128xf32>
    %91 = arith.addf %90, %89 : vector<8x128xf32>
    %92 = arith.divf %90, %91 : vector<8x128xf32>
    %93 = vector.extract_strided_slice %75 {offsets = [0, 256], sizes = [8, 128], strides = [1, 1]} : vector<8x384xf32> to vector<8x128xf32>
    %94 = vector.extract_strided_slice %76 {offsets = [0, 256], sizes = [8, 128], strides = [1, 1]} : vector<8x384xf32> to vector<8x128xf32>
    %95 = vector.broadcast %4 : vector<1x128xf32> to vector<8x128xf32>
    %96 = arith.addf %94, %95 : vector<8x128xf32>
    %97 = arith.mulf %84, %96 : vector<8x128xf32>
    %98 = arith.addf %93, %97 : vector<8x128xf32>
    %99 = math.tanh %98 : vector<8x128xf32>
    %cst_29 = arith.constant 1.000000e+00 : f32
    %100 = vector.broadcast %cst_29 : f32 to vector<8x128xf32>
    %101 = arith.subf %100, %92 : vector<8x128xf32>
    %102 = arith.mulf %101, %99 : vector<8x128xf32>
    %103 = arith.mulf %92, %70 : vector<8x128xf32>
    %104 = arith.addf %102, %103 : vector<8x128xf32>
    %c2_30 = arith.constant 2 : index
    %c0_31 = arith.constant 0 : index
    %c0_32 = arith.constant 0 : index
    %105 = vector.load %arg5[%c2_30, %c0_31, %c0_32] : memref<8x8x128xf32, #tpu.memory_space<vmem>>, vector<1x8x128xf32>
    %106 = vector.shape_cast %105 : vector<1x8x128xf32> to vector<8x128xf32>
    %107 = vector.shape_cast %104 : vector<8x128xf32> to vector<1x8x128xf32>
    tpu.vector_store %arg5[%c2_30, %c0_31, %c0_32], %107 {strides = array<i32>} : memref<8x8x128xf32, #tpu.memory_space<vmem>>, vector<1x8x128xf32>,
    %c3 = arith.constant 3 : index
    %c0_33 = arith.constant 0 : index
    %c0_34 = arith.constant 0 : index
    %108 = vector.load %arg1[%c3, %c0_33, %c0_34] : memref<8x8x384xf32, #tpu.memory_space<vmem>>, vector<1x8x384xf32>
    %109 = vector.shape_cast %108 : vector<1x8x384xf32> to vector<8x384xf32>
    %cst_35 = arith.constant dense<0.000000e+00> : vector<8x384xf32>
    %110 = tpu.matmul %104, %3, %cst_35 {dimension_numbers = #tpu.dot_dimension_numbers<[1], [0], [0], [1], [0, 0, 1, 1], [], []>} : vector<8x128xf32>, vector<128x384xf32>, vector<8x384xf32> -> vector<8x384xf32>
    %111 = vector.extract_strided_slice %109 {offsets = [0, 0], sizes = [8, 128], strides = [1, 1]} : vector<8x384xf32> to vector<8x128xf32>
    %112 = vector.extract_strided_slice %110 {offsets = [0, 0], sizes = [8, 128], strides = [1, 1]} : vector<8x384xf32> to vector<8x128xf32>
    %113 = arith.addf %111, %112 : vector<8x128xf32>
    %114 = arith.negf %113 : vector<8x128xf32>
    %115 = math.exp %114 : vector<8x128xf32>
    %cst_36 = arith.constant 1.000000e+00 : f32
    %116 = vector.broadcast %cst_36 : f32 to vector<8x128xf32>
    %117 = arith.addf %116, %115 : vector<8x128xf32>
    %118 = arith.divf %116, %117 : vector<8x128xf32>
    %119 = vector.extract_strided_slice %109 {offsets = [0, 128], sizes = [8, 128], strides = [1, 1]} : vector<8x384xf32> to vector<8x128xf32>
    %120 = vector.extract_strided_slice %110 {offsets = [0, 128], sizes = [8, 128], strides = [1, 1]} : vector<8x384xf32> to vector<8x128xf32>
    %121 = arith.addf %119, %120 : vector<8x128xf32>
    %122 = arith.negf %121 : vector<8x128xf32>
    %123 = math.exp %122 : vector<8x128xf32>
    %cst_37 = arith.constant 1.000000e+00 : f32
    %124 = vector.broadcast %cst_37 : f32 to vector<8x128xf32>
    %125 = arith.addf %124, %123 : vector<8x128xf32>
    %126 = arith.divf %124, %125 : vector<8x128xf32>
    %127 = vector.extract_strided_slice %109 {offsets = [0, 256], sizes = [8, 128], strides = [1, 1]} : vector<8x384xf32> to vector<8x128xf32>
    %128 = vector.extract_strided_slice %110 {offsets = [0, 256], sizes = [8, 128], strides = [1, 1]} : vector<8x384xf32> to vector<8x128xf32>
    %129 = vector.broadcast %4 : vector<1x128xf32> to vector<8x128xf32>
    %130 = arith.addf %128, %129 : vector<8x128xf32>
    %131 = arith.mulf %118, %130 : vector<8x128xf32>
    %132 = arith.addf %127, %131 : vector<8x128xf32>
    %133 = math.tanh %132 : vector<8x128xf32>
    %cst_38 = arith.constant 1.000000e+00 : f32
    %134 = vector.broadcast %cst_38 : f32 to vector<8x128xf32>
    %135 = arith.subf %134, %126 : vector<8x128xf32>
    %136 = arith.mulf %135, %133 : vector<8x128xf32>
    %137 = arith.mulf %126, %104 : vector<8x128xf32>
    %138 = arith.addf %136, %137 : vector<8x128xf32>
    %c3_39 = arith.constant 3 : index
    %c0_40 = arith.constant 0 : index
    %c0_41 = arith.constant 0 : index
    %139 = vector.load %arg5[%c3_39, %c0_40, %c0_41] : memref<8x8x128xf32, #tpu.memory_space<vmem>>, vector<1x8x128xf32>
    %140 = vector.shape_cast %139 : vector<1x8x128xf32> to vector<8x128xf32>
    %141 = vector.shape_cast %138 : vector<8x128xf32> to vector<1x8x128xf32>
    tpu.vector_store %arg5[%c3_39, %c0_40, %c0_41], %141 {strides = array<i32>} : memref<8x8x128xf32, #tpu.memory_space<vmem>>, vector<1x8x128xf32>,
    %c4 = arith.constant 4 : index
    %c0_42 = arith.constant 0 : index
    %c0_43 = arith.constant 0 : index
    %142 = vector.load %arg1[%c4, %c0_42, %c0_43] : memref<8x8x384xf32, #tpu.memory_space<vmem>>, vector<1x8x384xf32>
    %143 = vector.shape_cast %142 : vector<1x8x384xf32> to vector<8x384xf32>
    %cst_44 = arith.constant dense<0.000000e+00> : vector<8x384xf32>
    %144 = tpu.matmul %138, %3, %cst_44 {dimension_numbers = #tpu.dot_dimension_numbers<[1], [0], [0], [1], [0, 0, 1, 1], [], []>} : vector<8x128xf32>, vector<128x384xf32>, vector<8x384xf32> -> vector<8x384xf32>
    %145 = vector.extract_strided_slice %143 {offsets = [0, 0], sizes = [8, 128], strides = [1, 1]} : vector<8x384xf32> to vector<8x128xf32>
    %146 = vector.extract_strided_slice %144 {offsets = [0, 0], sizes = [8, 128], strides = [1, 1]} : vector<8x384xf32> to vector<8x128xf32>
    %147 = arith.addf %145, %146 : vector<8x128xf32>
    %148 = arith.negf %147 : vector<8x128xf32>
    %149 = math.exp %148 : vector<8x128xf32>
    %cst_45 = arith.constant 1.000000e+00 : f32
    %150 = vector.broadcast %cst_45 : f32 to vector<8x128xf32>
    %151 = arith.addf %150, %149 : vector<8x128xf32>
    %152 = arith.divf %150, %151 : vector<8x128xf32>
    %153 = vector.extract_strided_slice %143 {offsets = [0, 128], sizes = [8, 128], strides = [1, 1]} : vector<8x384xf32> to vector<8x128xf32>
    %154 = vector.extract_strided_slice %144 {offsets = [0, 128], sizes = [8, 128], strides = [1, 1]} : vector<8x384xf32> to vector<8x128xf32>
    %155 = arith.addf %153, %154 : vector<8x128xf32>
    %156 = arith.negf %155 : vector<8x128xf32>
    %157 = math.exp %156 : vector<8x128xf32>
    %cst_46 = arith.constant 1.000000e+00 : f32
    %158 = vector.broadcast %cst_46 : f32 to vector<8x128xf32>
    %159 = arith.addf %158, %157 : vector<8x128xf32>
    %160 = arith.divf %158, %159 : vector<8x128xf32>
    %161 = vector.extract_strided_slice %143 {offsets = [0, 256], sizes = [8, 128], strides = [1, 1]} : vector<8x384xf32> to vector<8x128xf32>
    %162 = vector.extract_strided_slice %144 {offsets = [0, 256], sizes = [8, 128], strides = [1, 1]} : vector<8x384xf32> to vector<8x128xf32>
    %163 = vector.broadcast %4 : vector<1x128xf32> to vector<8x128xf32>
    %164 = arith.addf %162, %163 : vector<8x128xf32>
    %165 = arith.mulf %152, %164 : vector<8x128xf32>
    %166 = arith.addf %161, %165 : vector<8x128xf32>
    %167 = math.tanh %166 : vector<8x128xf32>
    %cst_47 = arith.constant 1.000000e+00 : f32
    %168 = vector.broadcast %cst_47 : f32 to vector<8x128xf32>
    %169 = arith.subf %168, %160 : vector<8x128xf32>
    %170 = arith.mulf %169, %167 : vector<8x128xf32>
    %171 = arith.mulf %160, %138 : vector<8x128xf32>
    %172 = arith.addf %170, %171 : vector<8x128xf32>
    %c4_48 = arith.constant 4 : index
    %c0_49 = arith.constant 0 : index
    %c0_50 = arith.constant 0 : index
    %173 = vector.load %arg5[%c4_48, %c0_49, %c0_50] : memref<8x8x128xf32, #tpu.memory_space<vmem>>, vector<1x8x128xf32>
    %174 = vector.shape_cast %173 : vector<1x8x128xf32> to vector<8x128xf32>
    %175 = vector.shape_cast %172 : vector<8x128xf32> to vector<1x8x128xf32>
    tpu.vector_store %arg5[%c4_48, %c0_49, %c0_50], %175 {strides = array<i32>} : memref<8x8x128xf32, #tpu.memory_space<vmem>>, vector<1x8x128xf32>,
    %c5 = arith.constant 5 : index
    %c0_51 = arith.constant 0 : index
    %c0_52 = arith.constant 0 : index
    %176 = vector.load %arg1[%c5, %c0_51, %c0_52] : memref<8x8x384xf32, #tpu.memory_space<vmem>>, vector<1x8x384xf32>
    %177 = vector.shape_cast %176 : vector<1x8x384xf32> to vector<8x384xf32>
    %cst_53 = arith.constant dense<0.000000e+00> : vector<8x384xf32>
    %178 = tpu.matmul %172, %3, %cst_53 {dimension_numbers = #tpu.dot_dimension_numbers<[1], [0], [0], [1], [0, 0, 1, 1], [], []>} : vector<8x128xf32>, vector<128x384xf32>, vector<8x384xf32> -> vector<8x384xf32>
    %179 = vector.extract_strided_slice %177 {offsets = [0, 0], sizes = [8, 128], strides = [1, 1]} : vector<8x384xf32> to vector<8x128xf32>
    %180 = vector.extract_strided_slice %178 {offsets = [0, 0], sizes = [8, 128], strides = [1, 1]} : vector<8x384xf32> to vector<8x128xf32>
    %181 = arith.addf %179, %180 : vector<8x128xf32>
    %182 = arith.negf %181 : vector<8x128xf32>
    %183 = math.exp %182 : vector<8x128xf32>
    %cst_54 = arith.constant 1.000000e+00 : f32
    %184 = vector.broadcast %cst_54 : f32 to vector<8x128xf32>
    %185 = arith.addf %184, %183 : vector<8x128xf32>
    %186 = arith.divf %184, %185 : vector<8x128xf32>
    %187 = vector.extract_strided_slice %177 {offsets = [0, 128], sizes = [8, 128], strides = [1, 1]} : vector<8x384xf32> to vector<8x128xf32>
    %188 = vector.extract_strided_slice %178 {offsets = [0, 128], sizes = [8, 128], strides = [1, 1]} : vector<8x384xf32> to vector<8x128xf32>
    %189 = arith.addf %187, %188 : vector<8x128xf32>
    %190 = arith.negf %189 : vector<8x128xf32>
    %191 = math.exp %190 : vector<8x128xf32>
    %cst_55 = arith.constant 1.000000e+00 : f32
    %192 = vector.broadcast %cst_55 : f32 to vector<8x128xf32>
    %193 = arith.addf %192, %191 : vector<8x128xf32>
    %194 = arith.divf %192, %193 : vector<8x128xf32>
    %195 = vector.extract_strided_slice %177 {offsets = [0, 256], sizes = [8, 128], strides = [1, 1]} : vector<8x384xf32> to vector<8x128xf32>
    %196 = vector.extract_strided_slice %178 {offsets = [0, 256], sizes = [8, 128], strides = [1, 1]} : vector<8x384xf32> to vector<8x128xf32>
    %197 = vector.broadcast %4 : vector<1x128xf32> to vector<8x128xf32>
    %198 = arith.addf %196, %197 : vector<8x128xf32>
    %199 = arith.mulf %186, %198 : vector<8x128xf32>
    %200 = arith.addf %195, %199 : vector<8x128xf32>
    %201 = math.tanh %200 : vector<8x128xf32>
    %cst_56 = arith.constant 1.000000e+00 : f32
    %202 = vector.broadcast %cst_56 : f32 to vector<8x128xf32>
    %203 = arith.subf %202, %194 : vector<8x128xf32>
    %204 = arith.mulf %203, %201 : vector<8x128xf32>
    %205 = arith.mulf %194, %172 : vector<8x128xf32>
    %206 = arith.addf %204, %205 : vector<8x128xf32>
    %c5_57 = arith.constant 5 : index
    %c0_58 = arith.constant 0 : index
    %c0_59 = arith.constant 0 : index
    %207 = vector.load %arg5[%c5_57, %c0_58, %c0_59] : memref<8x8x128xf32, #tpu.memory_space<vmem>>, vector<1x8x128xf32>
    %208 = vector.shape_cast %207 : vector<1x8x128xf32> to vector<8x128xf32>
    %209 = vector.shape_cast %206 : vector<8x128xf32> to vector<1x8x128xf32>
    tpu.vector_store %arg5[%c5_57, %c0_58, %c0_59], %209 {strides = array<i32>} : memref<8x8x128xf32, #tpu.memory_space<vmem>>, vector<1x8x128xf32>,
    %c6 = arith.constant 6 : index
    %c0_60 = arith.constant 0 : index
    %c0_61 = arith.constant 0 : index
    %210 = vector.load %arg1[%c6, %c0_60, %c0_61] : memref<8x8x384xf32, #tpu.memory_space<vmem>>, vector<1x8x384xf32>
    %211 = vector.shape_cast %210 : vector<1x8x384xf32> to vector<8x384xf32>
    %cst_62 = arith.constant dense<0.000000e+00> : vector<8x384xf32>
    %212 = tpu.matmul %206, %3, %cst_62 {dimension_numbers = #tpu.dot_dimension_numbers<[1], [0], [0], [1], [0, 0, 1, 1], [], []>} : vector<8x128xf32>, vector<128x384xf32>, vector<8x384xf32> -> vector<8x384xf32>
    %213 = vector.extract_strided_slice %211 {offsets = [0, 0], sizes = [8, 128], strides = [1, 1]} : vector<8x384xf32> to vector<8x128xf32>
    %214 = vector.extract_strided_slice %212 {offsets = [0, 0], sizes = [8, 128], strides = [1, 1]} : vector<8x384xf32> to vector<8x128xf32>
    %215 = arith.addf %213, %214 : vector<8x128xf32>
    %216 = arith.negf %215 : vector<8x128xf32>
    %217 = math.exp %216 : vector<8x128xf32>
    %cst_63 = arith.constant 1.000000e+00 : f32
    %218 = vector.broadcast %cst_63 : f32 to vector<8x128xf32>
    %219 = arith.addf %218, %217 : vector<8x128xf32>
    %220 = arith.divf %218, %219 : vector<8x128xf32>
    %221 = vector.extract_strided_slice %211 {offsets = [0, 128], sizes = [8, 128], strides = [1, 1]} : vector<8x384xf32> to vector<8x128xf32>
    %222 = vector.extract_strided_slice %212 {offsets = [0, 128], sizes = [8, 128], strides = [1, 1]} : vector<8x384xf32> to vector<8x128xf32>
    %223 = arith.addf %221, %222 : vector<8x128xf32>
    %224 = arith.negf %223 : vector<8x128xf32>
    %225 = math.exp %224 : vector<8x128xf32>
    %cst_64 = arith.constant 1.000000e+00 : f32
    %226 = vector.broadcast %cst_64 : f32 to vector<8x128xf32>
    %227 = arith.addf %226, %225 : vector<8x128xf32>
    %228 = arith.divf %226, %227 : vector<8x128xf32>
    %229 = vector.extract_strided_slice %211 {offsets = [0, 256], sizes = [8, 128], strides = [1, 1]} : vector<8x384xf32> to vector<8x128xf32>
    %230 = vector.extract_strided_slice %212 {offsets = [0, 256], sizes = [8, 128], strides = [1, 1]} : vector<8x384xf32> to vector<8x128xf32>
    %231 = vector.broadcast %4 : vector<1x128xf32> to vector<8x128xf32>
    %232 = arith.addf %230, %231 : vector<8x128xf32>
    %233 = arith.mulf %220, %232 : vector<8x128xf32>
    %234 = arith.addf %229, %233 : vector<8x128xf32>
    %235 = math.tanh %234 : vector<8x128xf32>
    %cst_65 = arith.constant 1.000000e+00 : f32
    %236 = vector.broadcast %cst_65 : f32 to vector<8x128xf32>
    %237 = arith.subf %236, %228 : vector<8x128xf32>
    %238 = arith.mulf %237, %235 : vector<8x128xf32>
    %239 = arith.mulf %228, %206 : vector<8x128xf32>
    %240 = arith.addf %238, %239 : vector<8x128xf32>
    %c6_66 = arith.constant 6 : index
    %c0_67 = arith.constant 0 : index
    %c0_68 = arith.constant 0 : index
    %241 = vector.load %arg5[%c6_66, %c0_67, %c0_68] : memref<8x8x128xf32, #tpu.memory_space<vmem>>, vector<1x8x128xf32>
    %242 = vector.shape_cast %241 : vector<1x8x128xf32> to vector<8x128xf32>
    %243 = vector.shape_cast %240 : vector<8x128xf32> to vector<1x8x128xf32>
    tpu.vector_store %arg5[%c6_66, %c0_67, %c0_68], %243 {strides = array<i32>} : memref<8x8x128xf32, #tpu.memory_space<vmem>>, vector<1x8x128xf32>,
    %c7 = arith.constant 7 : index
    %c0_69 = arith.constant 0 : index
    %c0_70 = arith.constant 0 : index
    %244 = vector.load %arg1[%c7, %c0_69, %c0_70] : memref<8x8x384xf32, #tpu.memory_space<vmem>>, vector<1x8x384xf32>
    %245 = vector.shape_cast %244 : vector<1x8x384xf32> to vector<8x384xf32>
    %cst_71 = arith.constant dense<0.000000e+00> : vector<8x384xf32>
    %246 = tpu.matmul %240, %3, %cst_71 {dimension_numbers = #tpu.dot_dimension_numbers<[1], [0], [0], [1], [0, 0, 1, 1], [], []>} : vector<8x128xf32>, vector<128x384xf32>, vector<8x384xf32> -> vector<8x384xf32>
    %247 = vector.extract_strided_slice %245 {offsets = [0, 0], sizes = [8, 128], strides = [1, 1]} : vector<8x384xf32> to vector<8x128xf32>
    %248 = vector.extract_strided_slice %246 {offsets = [0, 0], sizes = [8, 128], strides = [1, 1]} : vector<8x384xf32> to vector<8x128xf32>
    %249 = arith.addf %247, %248 : vector<8x128xf32>
    %250 = arith.negf %249 : vector<8x128xf32>
    %251 = math.exp %250 : vector<8x128xf32>
    %cst_72 = arith.constant 1.000000e+00 : f32
    %252 = vector.broadcast %cst_72 : f32 to vector<8x128xf32>
    %253 = arith.addf %252, %251 : vector<8x128xf32>
    %254 = arith.divf %252, %253 : vector<8x128xf32>
    %255 = vector.extract_strided_slice %245 {offsets = [0, 128], sizes = [8, 128], strides = [1, 1]} : vector<8x384xf32> to vector<8x128xf32>
    %256 = vector.extract_strided_slice %246 {offsets = [0, 128], sizes = [8, 128], strides = [1, 1]} : vector<8x384xf32> to vector<8x128xf32>
    %257 = arith.addf %255, %256 : vector<8x128xf32>
    %258 = arith.negf %257 : vector<8x128xf32>
    %259 = math.exp %258 : vector<8x128xf32>
    %cst_73 = arith.constant 1.000000e+00 : f32
    %260 = vector.broadcast %cst_73 : f32 to vector<8x128xf32>
    %261 = arith.addf %260, %259 : vector<8x128xf32>
    %262 = arith.divf %260, %261 : vector<8x128xf32>
    %263 = vector.extract_strided_slice %245 {offsets = [0, 256], sizes = [8, 128], strides = [1, 1]} : vector<8x384xf32> to vector<8x128xf32>
    %264 = vector.extract_strided_slice %246 {offsets = [0, 256], sizes = [8, 128], strides = [1, 1]} : vector<8x384xf32> to vector<8x128xf32>
    %265 = vector.broadcast %4 : vector<1x128xf32> to vector<8x128xf32>
    %266 = arith.addf %264, %265 : vector<8x128xf32>
    %267 = arith.mulf %254, %266 : vector<8x128xf32>
    %268 = arith.addf %263, %267 : vector<8x128xf32>
    %269 = math.tanh %268 : vector<8x128xf32>
    %cst_74 = arith.constant 1.000000e+00 : f32
    %270 = vector.broadcast %cst_74 : f32 to vector<8x128xf32>
    %271 = arith.subf %270, %262 : vector<8x128xf32>
    %272 = arith.mulf %271, %269 : vector<8x128xf32>
    %273 = arith.mulf %262, %240 : vector<8x128xf32>
    %274 = arith.addf %272, %273 : vector<8x128xf32>
    %c7_75 = arith.constant 7 : index
    %c0_76 = arith.constant 0 : index
    %c0_77 = arith.constant 0 : index
    %275 = vector.load %arg5[%c7_75, %c0_76, %c0_77] : memref<8x8x128xf32, #tpu.memory_space<vmem>>, vector<1x8x128xf32>
    %276 = vector.shape_cast %275 : vector<1x8x128xf32> to vector<8x128xf32>
    %277 = vector.shape_cast %274 : vector<8x128xf32> to vector<1x8x128xf32>
    tpu.vector_store %arg5[%c7_75, %c0_76, %c0_77], %277 {strides = array<i32>} : memref<8x8x128xf32, #tpu.memory_space<vmem>>, vector<1x8x128xf32>,
    %c0_78 = arith.constant 0 : index
    %c0_79 = arith.constant 0 : index
    %278 = vector.load %arg6[%c0_78, %c0_79] : memref<8x128xf32, #tpu.memory_space<vmem>>, vector<8x128xf32>
    tpu.vector_store %arg6[%c0_78, %c0_79], %274 {strides = array<i32>} : memref<8x128xf32, #tpu.memory_space<vmem>>, vector<8x128xf32>,
    return
  }
  func.func @transform_0(%arg0: i32) -> (i32, i32, i32) {
    %c0_i32 = arith.constant 0 : i32
    %c0_i32_0 = arith.constant 0 : i32
    %c0_i32_1 = arith.constant 0 : i32
    return %arg0, %c0_i32, %c0_i32_0 : i32, i32, i32
  }
  func.func @transform_1(%arg0: i32) -> (i32, i32) {
    %c0_i32 = arith.constant 0 : i32
    %c0_i32_0 = arith.constant 0 : i32
    %c0_i32_1 = arith.constant 0 : i32
    return %c0_i32, %c0_i32_0 : i32, i32
  }
  func.func @transform_2(%arg0: i32) -> (i32, i32) {
    %c0_i32 = arith.constant 0 : i32
    %c0_i32_0 = arith.constant 0 : i32
    %c0_i32_1 = arith.constant 0 : i32
    return %c0_i32, %c0_i32_0 : i32, i32
  }
  func.func @transform_3(%arg0: i32) -> (i32, i32) {
    %c0_i32 = arith.constant 0 : i32
    %c0_i32_0 = arith.constant 0 : i32
    %c0_i32_1 = arith.constant 0 : i32
    return %c0_i32, %c0_i32_0 : i32, i32
  }
  func.func @transform_4(%arg0: i32) -> (i32, i32, i32) {
    %c0_i32 = arith.constant 0 : i32
    %c0_i32_0 = arith.constant 0 : i32
    %c0_i32_1 = arith.constant 0 : i32
    return %arg0, %c0_i32, %c0_i32_0 : i32, i32, i32
  }
}

</mosaic_0001>

<llo_original>
// kernel: tpu_custom_call.1
$region0: #{tpu_custom_call.1}
  #allocation0 [shape = 'u32[]', space=smem, size = 0x4, offset = 0x4, fixed_abs, tag = 'smem constant byte address 0x4 - core index']
  #allocation1 [shape = 'u32[144,128]{1,0:T(1,128)}', space=vmem, size = 0x12000, scoped, tag = 'internal scratch']
  #allocation2 [shape = 'f32[8,128]{1,0:T(8,128)}', space=vmem, size = 0x1000, scoped, tag = 'scratch operand']
  %s0 = inlined_call_operand.hbm [shape: f32[8,8,384], index: 0, kind: input, shape index: {}]
  %s1 = inlined_call_operand.hbm [shape: f32[8,128], index: 1, kind: input, shape index: {}]
  %s2 = inlined_call_operand.hbm [shape: f32[128,384], index: 2, kind: input, shape index: {}]
  %s3 = inlined_call_operand.vmem [shape: f32[1,128], index: 3, kind: input, shape index: {}]
  %s4 = inlined_call_operand.hbm [shape: f32[8,8,128], index: 4, kind: output, shape index: {}]
  %s5 = sld [smem:[#allocation0]]
  $region42: #{tpu_custom_call.1} parent=0
    _
  %s7 = ssub.s32 1, %s5
  %s8 = scalar_select 0, %s7, %s5
  $region1: #{tpu_custom_call.1} parent=0
    #allocation3 [shape = 'u8[98304]{0}', space=vmem, size = 0x18000, scoped, tag = 'input window, operand 0, single buffered']
    #allocation4 [shape = 's32[1]{0}', space=sflag, size = 0x4, scoped, tag = 'scoped memory for tpu_custom_call.1']
    #allocation5 [shape = 's32[1]{0}', space=sflag, size = 0x4, scoped, tag = 'scoped memory for tpu_custom_call.1']
    #allocation6 [shape = 'u8[4096]{0}', space=vmem, size = 0x1000, scoped, tag = 'input window, operand 1, single buffered']
    #allocation7 [shape = 's32[1]{0}', space=sflag, size = 0x4, scoped, tag = 'scoped memory for tpu_custom_call.1']
    #allocation8 [shape = 'u8[196608]{0}', space=vmem, size = 0x30000, scoped, tag = 'input window, operand 2, single buffered']
    #allocation9 [shape = 'u8[32768]{0}', space=vmem, size = 0x8000, scoped, tag = 'output window, operand 0, single buffered']
    %9 = vsyncpa [#allocation4], 0
    %10 = vsyncpa [#allocation7], 0
    %11 = vsyncpa [#allocation5], 0
    // Predicated region
    $region2: #{tpu_custom_call.1} parent=1 // pred_check
      _
    $region3: #{tpu_custom_call.1} parent=1 // pred_check_branch
      %13 = sbr.rel (0) target = $region5
    $region4: #{tpu_custom_call.1} parent=1 // pred_region
      %s15 = ssub.s32 3072, 3072
      %16 = vsyncadd [#allocation4], %s15
      %s17 = sshll.u32 [#allocation3], 4
      %s18 = int_to_ptr.vmem [resolvable:$true] %s17
      %23 = dma.hbm_to_vmem [thread:$0]  %s0, 3072, %s18, [#allocation4], 384, 384, 24
    $region5: #{tpu_custom_call.1} parent=1 // pred_fallthru
      _
    // Predicated region
    $region6: #{tpu_custom_call.1} parent=1 // pred_check
      _
    $region7: #{tpu_custom_call.1} parent=1 // pred_check_branch
      %25 = sbr.rel (0) target = $region9
    $region8: #{tpu_custom_call.1} parent=1 // pred_region
      %s27 = ssub.s32 128, 128
      %28 = vsyncadd [#allocation7], %s27
      %s30 = sshll.u32 [#allocation6], 4
      %s31 = int_to_ptr.vmem [resolvable:$true] %s30
      %33 = dma.hbm_to_vmem [thread:$0]  %s1, 128, %s31, [#allocation7]
    $region9: #{tpu_custom_call.1} parent=1 // pred_fallthru
      _
    // Predicated region
    $region10: #{tpu_custom_call.1} parent=1 // pred_check
      _
    $region11: #{tpu_custom_call.1} parent=1 // pred_check_branch
      %35 = sbr.rel (0) target = $region13
    $region12: #{tpu_custom_call.1} parent=1 // pred_region
      %s37 = ssub.s32 6144, 6144
      %38 = vsyncadd [#allocation7], %s37
      %s39 = sshll.u32 [#allocation8], 4
      %s40 = int_to_ptr.vmem [resolvable:$true] %s39
      %45 = dma.hbm_to_vmem [thread:$0]  %s2, 6144, %s40, [#allocation7], 384, 384, 24
    $region13: #{tpu_custom_call.1} parent=1 // pred_fallthru
      _
    // Predicated region
    $region14: #{tpu_custom_call.1} parent=1 // pred_check
      _
    $region15: #{tpu_custom_call.1} parent=1 // pred_check_branch
      %47 = sbr.rel (0) target = $region17
    $region16: #{tpu_custom_call.1} parent=1 // pred_region
      _
    $region17: #{tpu_custom_call.1} parent=1 // pred_fallthru
      _
    // Predicated region
    $region18: #{tpu_custom_call.1} parent=1 // pred_check
      _
    $region19: #{tpu_custom_call.1} parent=1 // pred_check_branch
      %49 = sbr.rel (0) target = $region21
    $region20: #{tpu_custom_call.1} parent=1 // pred_region
      %50 = dma.done [#allocation4], 3072
    $region21: #{tpu_custom_call.1} parent=1 // pred_fallthru
      _
    // Predicated region
    $region22: #{tpu_custom_call.1} parent=1 // pred_check
      _
    $region23: #{tpu_custom_call.1} parent=1 // pred_check_branch
      %52 = sbr.rel (0) target = $region25
    $region24: #{tpu_custom_call.1} parent=1 // pred_region
      %53 = dma.done [#allocation7], 128
    $region25: #{tpu_custom_call.1} parent=1 // pred_fallthru
      _
    // Predicated region
    $region26: #{tpu_custom_call.1} parent=1 // pred_check
      _
    $region27: #{tpu_custom_call.1} parent=1 // pred_check_branch
      %55 = sbr.rel (0) target = $region29
    $region28: #{tpu_custom_call.1} parent=1 // pred_region
      %56 = dma.done [#allocation7], 6144
    $region29: #{tpu_custom_call.1} parent=1 // pred_fallthru
      _
    %p57 = scmp.eq.s32.totalorder 0, 0
    // Predicated region
    $region30: #{tpu_custom_call.1} parent=1 // pred_check
      %p58 = pneg %p57
    $region31: #{tpu_custom_call.1} parent=1 // pred_check_branch
      %60 = sbr.rel (%p58) target = $region33
    $region32: #{tpu_custom_call.1} parent=1 // pred_region
      %v61 = vld [vmem:[#allocation6] sm:$0xff]
      %62 = vst [vmem:[#allocation2] sm:$0xff] %v61
    $region33: #{tpu_custom_call.1} parent=1 // pred_fallthru
      _
    %v63 = vld [vmem:[#allocation8] sm:$0xff]
    %v64 = vld [vmem:[#allocation8 + $0x8] sm:$0xff]
    %v65 = vld [vmem:[#allocation8 + $0x10] sm:$0xff]
    %v66 = vld [vmem:[#allocation8 + $0x18] sm:$0xff]
    %v67 = vld [vmem:[#allocation8 + $0x20] sm:$0xff]
    %v68 = vld [vmem:[#allocation8 + $0x28] sm:$0xff]
    %v69 = vld [vmem:[#allocation8 + $0x30] sm:$0xff]
    %v70 = vld [vmem:[#allocation8 + $0x38] sm:$0xff]
    %v71 = vld [vmem:[#allocation8 + $0x40] sm:$0xff]
    %v72 = vld [vmem:[#allocation8 + $0x48] sm:$0xff]
    %v73 = vld [vmem:[#allocation8 + $0x50] sm:$0xff]
    %v74 = vld [vmem:[#allocation8 + $0x58] sm:$0xff]
    %v75 = vld [vmem:[#allocation8 + $0x60] sm:$0xff]
    %v76 = vld [vmem:[#allocation8 + $0x68] sm:$0xff]
    %v77 = vld [vmem:[#allocation8 + $0x70] sm:$0xff]
    %v78 = vld [vmem:[#allocation8 + $0x78] sm:$0xff]
    %v79 = vld [vmem:[#allocation8 + $0x80] sm:$0xff]
    %v80 = vld [vmem:[#allocation8 + $0x88] sm:$0xff]
    %v81 = vld [vmem:[#allocation8 + $0x90] sm:$0xff]
    %v82 = vld [vmem:[#allocation8 + $0x98] sm:$0xff]
    %v83 = vld [vmem:[#allocation8 + $0xa0] sm:$0xff]
    %v84 = vld [vmem:[#allocation8 + $0xa8] sm:$0xff]
    %v85 = vld [vmem:[#allocation8 + $0xb0] sm:$0xff]
    %v86 = vld [vmem:[#allocation8 + $0xb8] sm:$0xff]
    %v87 = vld [vmem:[#allocation8 + $0xc0] sm:$0xff]
    %v88 = vld [vmem:[#allocation8 + $0xc8] sm:$0xff]
    %v89 = vld [vmem:[#allocation8 + $0xd0] sm:$0xff]
    %v90 = vld [vmem:[#allocation8 + $0xd8] sm:$0xff]
    %v91 = vld [vmem:[#allocation8 + $0xe0] sm:$0xff]
    %v92 = vld [vmem:[#allocation8 + $0xe8] sm:$0xff]
    %v93 = vld [vmem:[#allocation8 + $0xf0] sm:$0xff]
    %v94 = vld [vmem:[#allocation8 + $0xf8] sm:$0xff]
    %v95 = vld [vmem:[#allocation8 + $0x100] sm:$0xff]
    %v96 = vld [vmem:[#allocation8 + $0x108] sm:$0xff]
    %v97 = vld [vmem:[#allocation8 + $0x110] sm:$0xff]
    %v98 = vld [vmem:[#allocation8 + $0x118] sm:$0xff]
    %v99 = vld [vmem:[#allocation8 + $0x120] sm:$0xff]
    %v100 = vld [vmem:[#allocation8 + $0x128] sm:$0xff]
    %v101 = vld [vmem:[#allocation8 + $0x130] sm:$0xff]
    %v102 = vld [vmem:[#allocation8 + $0x138] sm:$0xff]
    %v103 = vld [vmem:[#allocation8 + $0x140] sm:$0xff]
    %v104 = vld [vmem:[#allocation8 + $0x148] sm:$0xff]
    %v105 = vld [vmem:[#allocation8 + $0x150] sm:$0xff]
    %v106 = vld [vmem:[#allocation8 + $0x158] sm:$0xff]
    %v107 = vld [vmem:[#allocation8 + $0x160] sm:$0xff]
    %v108 = vld [vmem:[#allocation8 + $0x168] sm:$0xff]
    %v109 = vld [vmem:[#allocation8 + $0x170] sm:$0xff]
    %v110 = vld [vmem:[#allocation8 + $0x178] sm:$0xff]
    %v111 = vld [vmem:[%s3] sm:$0x1]
    %v112 = vld [vmem:[#allocation2] sm:$0xff]
    %v113 = vld [vmem:[#allocation3] sm:$0xff]
    %v114 = vld [vmem:[#allocation3 + $0x8] sm:$0xff]
    %v115 = vld [vmem:[#allocation3 + $0x10] sm:$0xff]
    %116 = vmatprep.subr.mxu0 %v109
    %117 = vmatpush1.msra.mxu0 %v108
    %118 = vmatprep.subr.mxu0 %v106
    %119 = vmatpush1.msra.mxu0 %v105
    %120 = vmatprep.subr.mxu0 %v103
    %121 = vmatpush1.msra.mxu0 %v102
    %122 = vmatprep.subr.mxu0 %v100
    %123 = vmatpush1.msra.mxu0 %v99
    %124 = vmatprep.subr.mxu0 %v97
    %125 = vmatpush1.msra.mxu0 %v96
    %126 = vmatprep.subr.mxu0 %v94
    %127 = vmatpush1.msra.mxu0 %v93
    %128 = vmatprep.subr.mxu0 %v91
    %129 = vmatpush1.msra.mxu0 %v90
    %130 = vmatprep.subr.mxu0 %v88
    %131 = vmatpush1.msra.mxu0 %v87
    %132 = vmatprep.subr.mxu0 %v85
    %133 = vmatpush1.msra.mxu0 %v84
    %134 = vmatprep.subr.mxu0 %v82
    %135 = vmatpush1.msra.mxu0 %v81
    %136 = vmatprep.subr.mxu0 %v79
    %137 = vmatpush1.msra.mxu0 %v78
    %138 = vmatprep.subr.mxu0 %v76
    %139 = vmatpush1.msra.mxu0 %v75
    %140 = vmatprep.subr.mxu0 %v73
    %141 = vmatpush1.msra.mxu0 %v72
    %142 = vmatprep.subr.mxu0 %v70
    %143 = vmatpush1.msra.mxu0 %v69
    %144 = vmatprep.subr.mxu0 %v67
    %145 = vmatpush1.msra.mxu0 %v66
    %146 = vmatprep.subr.mxu0 %v64
    %147 = vmatpush1.msra.mxu0 %v63
    %148 = vmatprep.subr.mxu0 0.0
    %149 = vmatpush2.msra.mxu0 0.0
    %150 = vmatprep.subr.mxu0 0.0
    %151 = vmatpush2.msra.mxu0 0.0
    %152 = vmatprep.subr.mxu0 0.0
    %153 = vmatpush2.msra.mxu0 0.0
    %154 = vmatprep.subr.mxu0 0.0
    %155 = vmatpush2.msra.mxu0 0.0
    %156 = vmatprep.subr.mxu0 0.0
    %157 = vmatpush2.msra.mxu0 0.0
    %158 = vmatprep.subr.mxu0 0.0
    %159 = vmatpush2.msra.mxu0 0.0
    %160 = vmatprep.subr.mxu0 0.0
    %161 = vmatpush2.msra.mxu0 0.0
    %162 = vmatprep.subr.mxu0 0.0
    %163 = vmatpush2.msra.mxu0 0.0
    %164 = vmatprep.subr.mxu0 0.0
    %165 = vmatpush2.msra.mxu0 0.0
    %166 = vmatprep.subr.mxu0 0.0
    %167 = vmatpush2.msra.mxu0 0.0
    %168 = vmatprep.subr.mxu0 0.0
    %169 = vmatpush2.msra.mxu0 0.0
    %170 = vmatprep.subr.mxu0 0.0
    %171 = vmatpush2.msra.mxu0 0.0
    %172 = vmatprep.subr.mxu0 0.0
    %173 = vmatpush2.msra.mxu0 0.0
    %174 = vmatprep.subr.mxu0 0.0
    %175 = vmatpush2.msra.mxu0 0.0
    %176 = vmatprep.subr.mxu0 0.0
    %177 = vmatpush2.msra.mxu0 0.0
    %178 = vmatprep.subr.mxu0 0.0
    %179 = vmatpush2.msra.mxu0 0.0
    %180 = vmatprep.mubr.f32.mxu0 0.0
    %181 = vmatmul.mubr.f32.gmra.mxu0 %v112
    %v182 = vpop.f32.mrf.mxu0
    %v183 = vadd.f32 0.0, %v182
    %v184 = vpop.f32.mrf.mxu0
    %v185 = vadd.f32 0.0, %v184
    %186 = vdwg.mxu0
    %187 = vmatprep.subr.mxu0 0.0
    %188 = vmatpush1.msra.mxu0 %v110
    %189 = vmatprep.subr.mxu0 0.0
    %190 = vmatpush1.msra.mxu0 %v107
    %191 = vmatprep.subr.mxu0 0.0
    %192 = vmatpush1.msra.mxu0 %v104
    %193 = vmatprep.subr.mxu0 0.0
    %194 = vmatpush1.msra.mxu0 %v101
    %195 = vmatprep.subr.mxu0 0.0
    %196 = vmatpush1.msra.mxu0 %v98
    %197 = vmatprep.subr.mxu0 0.0
    %198 = vmatpush1.msra.mxu0 %v95
    %199 = vmatprep.subr.mxu0 0.0
    %200 = vmatpush1.msra.mxu0 %v92
    %201 = vmatprep.subr.mxu0 0.0
    %202 = vmatpush1.msra.mxu0 %v89
    %203 = vmatprep.subr.mxu0 0.0
    %204 = vmatpush1.msra.mxu0 %v86
    %205 = vmatprep.subr.mxu0 0.0
    %206 = vmatpush1.msra.mxu0 %v83
    %207 = vmatprep.subr.mxu0 0.0
    %208 = vmatpush1.msra.mxu0 %v80
    %209 = vmatprep.subr.mxu0 0.0
    %210 = vmatpush1.msra.mxu0 %v77
    %211 = vmatprep.subr.mxu0 0.0
    %212 = vmatpush1.msra.mxu0 %v74
    %213 = vmatprep.subr.mxu0 0.0
    %214 = vmatpush1.msra.mxu0 %v71
    %215 = vmatprep.subr.mxu0 0.0
    %216 = vmatpush1.msra.mxu0 %v68
    %217 = vmatprep.subr.mxu0 0.0
    %218 = vmatpush1.msra.mxu0 %v65
    %219 = vmatprep.subr.mxu0 0.0
    %220 = vmatpush2.msra.mxu0 0.0
    %221 = vmatprep.subr.mxu0 0.0
    %222 = vmatpush2.msra.mxu0 0.0
    %223 = vmatprep.subr.mxu0 0.0
    %224 = vmatpush2.msra.mxu0 0.0
    %225 = vmatprep.subr.mxu0 0.0
    %226 = vmatpush2.msra.mxu0 0.0
    %227 = vmatprep.subr.mxu0 0.0
    %228 = vmatpush2.msra.mxu0 0.0
    %229 = vmatprep.subr.mxu0 0.0
    %230 = vmatpush2.msra.mxu0 0.0
    %231 = vmatprep.subr.mxu0 0.0
    %232 = vmatpush2.msra.mxu0 0.0
    %233 = vmatprep.subr.mxu0 0.0
    %234 = vmatpush2.msra.mxu0 0.0
    %235 = vmatprep.subr.mxu0 0.0
    %236 = vmatpush2.msra.mxu0 0.0
    %237 = vmatprep.subr.mxu0 0.0
    %238 = vmatpush2.msra.mxu0 0.0
    %239 = vmatprep.subr.mxu0 0.0
    %240 = vmatpush2.msra.mxu0 0.0
    %241 = vmatprep.subr.mxu0 0.0
    %242 = vmatpush2.msra.mxu0 0.0
    %243 = vmatprep.subr.mxu0 0.0
    %244 = vmatpush2.msra.mxu0 0.0
    %245 = vmatprep.subr.mxu0 0.0
    %246 = vmatpush2.msra.mxu0 0.0
    %247 = vmatprep.subr.mxu0 0.0
    %248 = vmatpush2.msra.mxu0 0.0
    %249 = vmatprep.subr.mxu0 0.0
    %250 = vmatpush2.msra.mxu0 0.0
    %251 = vmatprep.mubr.f32.mxu0 0.0
    %252 = vmatmul.mubr.f32.gmra.mxu0 %v112
    %v253 = vpop.f32.mrf.mxu0
    %v254 = vadd.f32 0.0, %v253
    %v255 = vpop.f32.mrf.mxu0
    %256 = vdwg.mxu0
    %v257 = vadd.f32 %v113, %v183
    %v258 = vxor.u32 %v257, 2147483648
    %v259 = vmul.f32 %v258, 1.442695
    %v260 = vpow.pop %v259
    %v261 = vadd.f32 %v260, 1.0
    %v262 = vrcp.pop %v261
    %v263 = vmul.f32 1.0, %v262
    %v264 = vadd.f32 %v114, %v185
    %v265 = vxor.u32 %v264, 2147483648
    %v266 = vmul.f32 %v265, 1.442695
    %v267 = vpow.pop %v266
    %v268 = vadd.f32 %v267, 1.0
    %v269 = vrcp.pop %v268
    %v270 = vmul.f32 1.0, %v269
    %v272 = vlaneseq
    %v273 = vshrl.u32 %v272, 7
    %v274 = vsub.s32 0, %v273
    %v275 = vrot.slane %v111, %v274
    %v277 = vadd.f32 %v254, %v275
    %v278 = vmul.f32 %v263, %v277
    %v279 = vadd.f32 %v115, %v278
    %v280 = vtanh.pop %v279
    %v281 = vsub.f32 1.0, %v270
    %v282 = vmul.f32 %v281, %v280
    %v283 = vmul.f32 %v270, %v112
    %v284 = vadd.f32 %v282, %v283
    %285 = vst [vmem:[#allocation9] sm:$0xff] %v284
    %s286 = scalar_lea.vmem [#allocation3], 24
    %v287 = vld [vmem:[%s286] sm:$0xff]
    %v288 = vld [vmem:[%s286 + $0x8] sm:$0xff]
    %v289 = vld [vmem:[%s286 + $0x10] sm:$0xff]
    %290 = vmatprep.subr.mxu0 %v109
    %291 = vmatpush1.msra.mxu0 %v108
    %292 = vmatprep.subr.mxu0 %v106
    %293 = vmatpush1.msra.mxu0 %v105
    %294 = vmatprep.subr.mxu0 %v103
    %295 = vmatpush1.msra.mxu0 %v102
    %296 = vmatprep.subr.mxu0 %v100
    %297 = vmatpush1.msra.mxu0 %v99
    %298 = vmatprep.subr.mxu0 %v97
    %299 = vmatpush1.msra.mxu0 %v96
    %300 = vmatprep.subr.mxu0 %v94
    %301 = vmatpush1.msra.mxu0 %v93
    %302 = vmatprep.subr.mxu0 %v91
    %303 = vmatpush1.msra.mxu0 %v90
    %304 = vmatprep.subr.mxu0 %v88
    %305 = vmatpush1.msra.mxu0 %v87
    %306 = vmatprep.subr.mxu0 %v85
    %307 = vmatpush1.msra.mxu0 %v84
    %308 = vmatprep.subr.mxu0 %v82
    %309 = vmatpush1.msra.mxu0 %v81
    %310 = vmatprep.subr.mxu0 %v79
    %311 = vmatpush1.msra.mxu0 %v78
    %312 = vmatprep.subr.mxu0 %v76
    %313 = vmatpush1.msra.mxu0 %v75
    %314 = vmatprep.subr.mxu0 %v73
    %315 = vmatpush1.msra.mxu0 %v72
    %316 = vmatprep.subr.mxu0 %v70
    %317 = vmatpush1.msra.mxu0 %v69
    %318 = vmatprep.subr.mxu0 %v67
    %319 = vmatpush1.msra.mxu0 %v66
    %320 = vmatprep.subr.mxu0 %v64
    %321 = vmatpush1.msra.mxu0 %v63
    %322 = vmatprep.subr.mxu0 0.0
    %323 = vmatpush2.msra.mxu0 0.0
    %324 = vmatprep.subr.mxu0 0.0
    %325 = vmatpush2.msra.mxu0 0.0
    %326 = vmatprep.subr.mxu0 0.0
    %327 = vmatpush2.msra.mxu0 0.0
    %328 = vmatprep.subr.mxu0 0.0
    %329 = vmatpush2.msra.mxu0 0.0
    %330 = vmatprep.subr.mxu0 0.0
    %331 = vmatpush2.msra.mxu0 0.0
    %332 = vmatprep.subr.mxu0 0.0
    %333 = vmatpush2.msra.mxu0 0.0
    %334 = vmatprep.subr.mxu0 0.0
    %335 = vmatpush2.msra.mxu0 0.0
    %336 = vmatprep.subr.mxu0 0.0
    %337 = vmatpush2.msra.mxu0 0.0
    %338 = vmatprep.subr.mxu0 0.0
    %339 = vmatpush2.msra.mxu0 0.0
    %340 = vmatprep.subr.mxu0 0.0
    %341 = vmatpush2.msra.mxu0 0.0
    %342 = vmatprep.subr.mxu0 0.0
    %343 = vmatpush2.msra.mxu0 0.0
    %344 = vmatprep.subr.mxu0 0.0
    %345 = vmatpush2.msra.mxu0 0.0
    %346 = vmatprep.subr.mxu0 0.0
    %347 = vmatpush2.msra.mxu0 0.0
    %348 = vmatprep.subr.mxu0 0.0
    %349 = vmatpush2.msra.mxu0 0.0
    %350 = vmatprep.subr.mxu0 0.0
    %351 = vmatpush2.msra.mxu0 0.0
    %352 = vmatprep.subr.mxu0 0.0
    %353 = vmatpush2.msra.mxu0 0.0
    %354 = vmatprep.mubr.f32.mxu0 0.0
    %355 = vmatmul.mubr.f32.gmra.mxu0 %v284
    %v356 = vpop.f32.mrf.mxu0
    %v357 = vadd.f32 0.0, %v356
    %v358 = vpop.f32.mrf.mxu0
    %v359 = vadd.f32 0.0, %v358
    %360 = vdwg.mxu0
    %361 = vmatprep.subr.mxu0 0.0
    %362 = vmatpush1.msra.mxu0 %v110
    %363 = vmatprep.subr.mxu0 0.0
    %364 = vmatpush1.msra.mxu0 %v107
    %365 = vmatprep.subr.mxu0 0.0
    %366 = vmatpush1.msra.mxu0 %v104
    %367 = vmatprep.subr.mxu0 0.0
    %368 = vmatpush1.msra.mxu0 %v101
    %369 = vmatprep.subr.mxu0 0.0
    %370 = vmatpush1.msra.mxu0 %v98
    %371 = vmatprep.subr.mxu0 0.0
    %372 = vmatpush1.msra.mxu0 %v95
    %373 = vmatprep.subr.mxu0 0.0
    %374 = vmatpush1.msra.mxu0 %v92
    %375 = vmatprep.subr.mxu0 0.0
    %376 = vmatpush1.msra.mxu0 %v89
    %377 = vmatprep.subr.mxu0 0.0
    %378 = vmatpush1.msra.mxu0 %v86
    %379 = vmatprep.subr.mxu0 0.0
    %380 = vmatpush1.msra.mxu0 %v83
    %381 = vmatprep.subr.mxu0 0.0
    %382 = vmatpush1.msra.mxu0 %v80
    %383 = vmatprep.subr.mxu0 0.0
    %384 = vmatpush1.msra.mxu0 %v77
    %385 = vmatprep.subr.mxu0 0.0
    %386 = vmatpush1.msra.mxu0 %v74
    %387 = vmatprep.subr.mxu0 0.0
    %388 = vmatpush1.msra.mxu0 %v71
    %389 = vmatprep.subr.mxu0 0.0
    %390 = vmatpush1.msra.mxu0 %v68
    %391 = vmatprep.subr.mxu0 0.0
    %392 = vmatpush1.msra.mxu0 %v65
    %393 = vmatprep.subr.mxu0 0.0
    %394 = vmatpush2.msra.mxu0 0.0
    %395 = vmatprep.subr.mxu0 0.0
    %396 = vmatpush2.msra.mxu0 0.0
    %397 = vmatprep.subr.mxu0 0.0
    %398 = vmatpush2.msra.mxu0 0.0
    %399 = vmatprep.subr.mxu0 0.0
    %400 = vmatpush2.msra.mxu0 0.0
    %401 = vmatprep.subr.mxu0 0.0
    %402 = vmatpush2.msra.mxu0 0.0
    %403 = vmatprep.subr.mxu0 0.0
    %404 = vmatpush2.msra.mxu0 0.0
    %405 = vmatprep.subr.mxu0 0.0
    %406 = vmatpush2.msra.mxu0 0.0
    %407 = vmatprep.subr.mxu0 0.0
    %408 = vmatpush2.msra.mxu0 0.0
    %409 = vmatprep.subr.mxu0 0.0
    %410 = vmatpush2.msra.mxu0 0.0
    %411 = vmatprep.subr.mxu0 0.0
    %412 = vmatpush2.msra.mxu0 0.0
    %413 = vmatprep.subr.mxu0 0.0
    %414 = vmatpush2.msra.mxu0 0.0
    %415 = vmatprep.subr.mxu0 0.0
    %416 = vmatpush2.msra.mxu0 0.0
    %417 = vmatprep.subr.mxu0 0.0
    %418 = vmatpush2.msra.mxu0 0.0
    %419 = vmatprep.subr.mxu0 0.0
    %420 = vmatpush2.msra.mxu0 0.0
    %421 = vmatprep.subr.mxu0 0.0
    %422 = vmatpush2.msra.mxu0 0.0
    %423 = vmatprep.subr.mxu0 0.0
    %424 = vmatpush2.msra.mxu0 0.0
    %425 = vmatprep.mubr.f32.mxu0 0.0
    %426 = vmatmul.mubr.f32.gmra.mxu0 %v284
    %v427 = vpop.f32.mrf.mxu0
    %v428 = vadd.f32 0.0, %v427
    %v429 = vpop.f32.mrf.mxu0
    %430 = vdwg.mxu0
    %v431 = vadd.f32 %v287, %v357
    %v432 = vxor.u32 %v431, 2147483648
    %v433 = vmul.f32 %v432, 1.442695
    %v434 = vpow.pop %v433
    %v435 = vadd.f32 %v434, 1.0
    %v436 = vrcp.pop %v435
    %v437 = vmul.f32 1.0, %v436
    %v438 = vadd.f32 %v288, %v359
    %v439 = vxor.u32 %v438, 2147483648
    %v440 = vmul.f32 %v439, 1.442695
    %v441 = vpow.pop %v440
    %v442 = vadd.f32 %v441, 1.0
    %v443 = vrcp.pop %v442
    %v444 = vmul.f32 1.0, %v443
    %v445 = vadd.f32 %v428, %v275
    %v446 = vmul.f32 %v437, %v445
    %v447 = vadd.f32 %v289, %v446
    %v448 = vtanh.pop %v447
    %v449 = vsub.f32 1.0, %v444
    %v450 = vmul.f32 %v449, %v448
    %v451 = vmul.f32 %v444, %v284
    %v452 = vadd.f32 %v450, %v451
    %s453 = scalar_lea.vmem [#allocation9], 8
    %454 = vst [vmem:[%s453] sm:$0xff] %v452
    %s455 = scalar_lea.vmem [#allocation3], 48
    %v456 = vld [vmem:[%s455] sm:$0xff]
    %v457 = vld [vmem:[%s455 + $0x8] sm:$0xff]
    %v458 = vld [vmem:[%s455 + $0x10] sm:$0xff]
    %459 = vmatprep.subr.mxu0 %v109
    %460 = vmatpush1.msra.mxu0 %v108
    %461 = vmatprep.subr.mxu0 %v106
    %462 = vmatpush1.msra.mxu0 %v105
    %463 = vmatprep.subr.mxu0 %v103
    %464 = vmatpush1.msra.mxu0 %v102
    %465 = vmatprep.subr.mxu0 %v100
    %466 = vmatpush1.msra.mxu0 %v99
    %467 = vmatprep.subr.mxu0 %v97
    %468 = vmatpush1.msra.mxu0 %v96
    %469 = vmatprep.subr.mxu0 %v94
    %470 = vmatpush1.msra.mxu0 %v93
    %471 = vmatprep.subr.mxu0 %v91
    %472 = vmatpush1.msra.mxu0 %v90
    %473 = vmatprep.subr.mxu0 %v88
    %474 = vmatpush1.msra.mxu0 %v87
    %475 = vmatprep.subr.mxu0 %v85
    %476 = vmatpush1.msra.mxu0 %v84
    %477 = vmatprep.subr.mxu0 %v82
    %478 = vmatpush1.msra.mxu0 %v81
    %479 = vmatprep.subr.mxu0 %v79
    %480 = vmatpush1.msra.mxu0 %v78
    %481 = vmatprep.subr.mxu0 %v76
    %482 = vmatpush1.msra.mxu0 %v75
    %483 = vmatprep.subr.mxu0 %v73
    %484 = vmatpush1.msra.mxu0 %v72
    %485 = vmatprep.subr.mxu0 %v70
    %486 = vmatpush1.msra.mxu0 %v69
    %487 = vmatprep.subr.mxu0 %v67
    %488 = vmatpush1.msra.mxu0 %v66
    %489 = vmatprep.subr.mxu0 %v64
    %490 = vmatpush1.msra.mxu0 %v63
    %491 = vmatprep.subr.mxu0 0.0
    %492 = vmatpush2.msra.mxu0 0.0
    %493 = vmatprep.subr.mxu0 0.0
    %494 = vmatpush2.msra.mxu0 0.0
    %495 = vmatprep.subr.mxu0 0.0
    %496 = vmatpush2.msra.mxu0 0.0
    %497 = vmatprep.subr.mxu0 0.0
    %498 = vmatpush2.msra.mxu0 0.0
    %499 = vmatprep.subr.mxu0 0.0
    %500 = vmatpush2.msra.mxu0 0.0
    %501 = vmatprep.subr.mxu0 0.0
    %502 = vmatpush2.msra.mxu0 0.0
    %503 = vmatprep.subr.mxu0 0.0
    %504 = vmatpush2.msra.mxu0 0.0
    %505 = vmatprep.subr.mxu0 0.0
    %506 = vmatpush2.msra.mxu0 0.0
    %507 = vmatprep.subr.mxu0 0.0
    %508 = vmatpush2.msra.mxu0 0.0
    %509 = vmatprep.subr.mxu0 0.0
    %510 = vmatpush2.msra.mxu0 0.0
    %511 = vmatprep.subr.mxu0 0.0
    %512 = vmatpush2.msra.mxu0 0.0
    %513 = vmatprep.subr.mxu0 0.0
    %514 = vmatpush2.msra.mxu0 0.0
    %515 = vmatprep.subr.mxu0 0.0
    %516 = vmatpush2.msra.mxu0 0.0
    %517 = vmatprep.subr.mxu0 0.0
    %518 = vmatpush2.msra.mxu0 0.0
    %519 = vmatprep.subr.mxu0 0.0
    %520 = vmatpush2.msra.mxu0 0.0
    %521 = vmatprep.subr.mxu0 0.0
    %522 = vmatpush2.msra.mxu0 0.0
    %523 = vmatprep.mubr.f32.mxu0 0.0
    %524 = vmatmul.mubr.f32.gmra.mxu0 %v452
    %v525 = vpop.f32.mrf.mxu0
    %v526 = vadd.f32 0.0, %v525
    %v527 = vpop.f32.mrf.mxu0
    %v528 = vadd.f32 0.0, %v527
    %529 = vdwg.mxu0
    %530 = vmatprep.subr.mxu0 0.0
    %531 = vmatpush1.msra.mxu0 %v110
    %532 = vmatprep.subr.mxu0 0.0
    %533 = vmatpush1.msra.mxu0 %v107
    %534 = vmatprep.subr.mxu0 0.0
    %535 = vmatpush1.msra.mxu0 %v104
    %536 = vmatprep.subr.mxu0 0.0
    %537 = vmatpush1.msra.mxu0 %v101
    %538 = vmatprep.subr.mxu0 0.0
    %539 = vmatpush1.msra.mxu0 %v98
    %540 = vmatprep.subr.mxu0 0.0
    %541 = vmatpush1.msra.mxu0 %v95
    %542 = vmatprep.subr.mxu0 0.0
    %543 = vmatpush1.msra.mxu0 %v92
    %544 = vmatprep.subr.mxu0 0.0
    %545 = vmatpush1.msra.mxu0 %v89
    %546 = vmatprep.subr.mxu0 0.0
    %547 = vmatpush1.msra.mxu0 %v86
    %548 = vmatprep.subr.mxu0 0.0
    %549 = vmatpush1.msra.mxu0 %v83
    %550 = vmatprep.subr.mxu0 0.0
    %551 = vmatpush1.msra.mxu0 %v80
    %552 = vmatprep.subr.mxu0 0.0
    %553 = vmatpush1.msra.mxu0 %v77
    %554 = vmatprep.subr.mxu0 0.0
    %555 = vmatpush1.msra.mxu0 %v74
    %556 = vmatprep.subr.mxu0 0.0
    %557 = vmatpush1.msra.mxu0 %v71
    %558 = vmatprep.subr.mxu0 0.0
    %559 = vmatpush1.msra.mxu0 %v68
    %560 = vmatprep.subr.mxu0 0.0
    %561 = vmatpush1.msra.mxu0 %v65
    %562 = vmatprep.subr.mxu0 0.0
    %563 = vmatpush2.msra.mxu0 0.0
    %564 = vmatprep.subr.mxu0 0.0
    %565 = vmatpush2.msra.mxu0 0.0
    %566 = vmatprep.subr.mxu0 0.0
    %567 = vmatpush2.msra.mxu0 0.0
    %568 = vmatprep.subr.mxu0 0.0
    %569 = vmatpush2.msra.mxu0 0.0
    %570 = vmatprep.subr.mxu0 0.0
    %571 = vmatpush2.msra.mxu0 0.0
    %572 = vmatprep.subr.mxu0 0.0
    %573 = vmatpush2.msra.mxu0 0.0
    %574 = vmatprep.subr.mxu0 0.0
    %575 = vmatpush2.msra.mxu0 0.0
    %576 = vmatprep.subr.mxu0 0.0
    %577 = vmatpush2.msra.mxu0 0.0
    %578 = vmatprep.subr.mxu0 0.0
    %579 = vmatpush2.msra.mxu0 0.0
    %580 = vmatprep.subr.mxu0 0.0
    %581 = vmatpush2.msra.mxu0 0.0
    %582 = vmatprep.subr.mxu0 0.0
    %583 = vmatpush2.msra.mxu0 0.0
    %584 = vmatprep.subr.mxu0 0.0
    %585 = vmatpush2.msra.mxu0 0.0
    %586 = vmatprep.subr.mxu0 0.0
    %587 = vmatpush2.msra.mxu0 0.0
    %588 = vmatprep.subr.mxu0 0.0
    %589 = vmatpush2.msra.mxu0 0.0
    %590 = vmatprep.subr.mxu0 0.0
    %591 = vmatpush2.msra.mxu0 0.0
    %592 = vmatprep.subr.mxu0 0.0
    %593 = vmatpush2.msra.mxu0 0.0
    %594 = vmatprep.mubr.f32.mxu0 0.0
    %595 = vmatmul.mubr.f32.gmra.mxu0 %v452
    %v596 = vpop.f32.mrf.mxu0
    %v597 = vadd.f32 0.0, %v596
    %v598 = vpop.f32.mrf.mxu0
    %599 = vdwg.mxu0
    %v600 = vadd.f32 %v456, %v526
    %v601 = vxor.u32 %v600, 2147483648
    %v602 = vmul.f32 %v601, 1.442695
    %v603 = vpow.pop %v602
    %v604 = vadd.f32 %v603, 1.0
    %v605 = vrcp.pop %v604
    %v606 = vmul.f32 1.0, %v605
    %v607 = vadd.f32 %v457, %v528
    %v608 = vxor.u32 %v607, 2147483648
    %v609 = vmul.f32 %v608, 1.442695
    %v610 = vpow.pop %v609
    %v611 = vadd.f32 %v610, 1.0
    %v612 = vrcp.pop %v611
    %v613 = vmul.f32 1.0, %v612
    %v614 = vadd.f32 %v597, %v275
    %v615 = vmul.f32 %v606, %v614
    %v616 = vadd.f32 %v458, %v615
    %v617 = vtanh.pop %v616
    %v618 = vsub.f32 1.0, %v613
    %v619 = vmul.f32 %v618, %v617
    %v620 = vmul.f32 %v613, %v452
    %v621 = vadd.f32 %v619, %v620
    %s622 = scalar_lea.vmem [#allocation9], 16
    %623 = vst [vmem:[%s622] sm:$0xff] %v621
    %s624 = scalar_lea.vmem [#allocation3], 72
    %v625 = vld [vmem:[%s624] sm:$0xff]
    %v626 = vld [vmem:[%s624 + $0x8] sm:$0xff]
    %v627 = vld [vmem:[%s624 + $0x10] sm:$0xff]
    %628 = vmatprep.subr.mxu0 %v109
    %629 = vmatpush1.msra.mxu0 %v108
    %630 = vmatprep.subr.mxu0 %v106
    %631 = vmatpush1.msra.mxu0 %v105
    %632 = vmatprep.subr.mxu0 %v103
    %633 = vmatpush1.msra.mxu0 %v102
    %634 = vmatprep.subr.mxu0 %v100
    %635 = vmatpush1.msra.mxu0 %v99
    %636 = vmatprep.subr.mxu0 %v97
    %637 = vmatpush1.msra.mxu0 %v96
    %638 = vmatprep.subr.mxu0 %v94
    %639 = vmatpush1.msra.mxu0 %v93
    %640 = vmatprep.subr.mxu0 %v91
    %641 = vmatpush1.msra.mxu0 %v90
    %642 = vmatprep.subr.mxu0 %v88
    %643 = vmatpush1.msra.mxu0 %v87
    %644 = vmatprep.subr.mxu0 %v85
    %645 = vmatpush1.msra.mxu0 %v84
    %646 = vmatprep.subr.mxu0 %v82
    %647 = vmatpush1.msra.mxu0 %v81
    %648 = vmatprep.subr.mxu0 %v79
    %649 = vmatpush1.msra.mxu0 %v78
    %650 = vmatprep.subr.mxu0 %v76
    %651 = vmatpush1.msra.mxu0 %v75
    %652 = vmatprep.subr.mxu0 %v73
    %653 = vmatpush1.msra.mxu0 %v72
    %654 = vmatprep.subr.mxu0 %v70
    %655 = vmatpush1.msra.mxu0 %v69
    %656 = vmatprep.subr.mxu0 %v67
    %657 = vmatpush1.msra.mxu0 %v66
    %658 = vmatprep.subr.mxu0 %v64
    %659 = vmatpush1.msra.mxu0 %v63
    %660 = vmatprep.subr.mxu0 0.0
    %661 = vmatpush2.msra.mxu0 0.0
    %662 = vmatprep.subr.mxu0 0.0
    %663 = vmatpush2.msra.mxu0 0.0
    %664 = vmatprep.subr.mxu0 0.0
    %665 = vmatpush2.msra.mxu0 0.0
    %666 = vmatprep.subr.mxu0 0.0
    %667 = vmatpush2.msra.mxu0 0.0
    %668 = vmatprep.subr.mxu0 0.0
    %669 = vmatpush2.msra.mxu0 0.0
    %670 = vmatprep.subr.mxu0 0.0
    %671 = vmatpush2.msra.mxu0 0.0
    %672 = vmatprep.subr.mxu0 0.0
    %673 = vmatpush2.msra.mxu0 0.0
    %674 = vmatprep.subr.mxu0 0.0
    %675 = vmatpush2.msra.mxu0 0.0
    %676 = vmatprep.subr.mxu0 0.0
    %677 = vmatpush2.msra.mxu0 0.0
    %678 = vmatprep.subr.mxu0 0.0
    %679 = vmatpush2.msra.mxu0 0.0
    %680 = vmatprep.subr.mxu0 0.0
    %681 = vmatpush2.msra.mxu0 0.0
    %682 = vmatprep.subr.mxu0 0.0
    %683 = vmatpush2.msra.mxu0 0.0
    %684 = vmatprep.subr.mxu0 0.0
    %685 = vmatpush2.msra.mxu0 0.0
    %686 = vmatprep.subr.mxu0 0.0
    %687 = vmatpush2.msra.mxu0 0.0
    %688 = vmatprep.subr.mxu0 0.0
    %689 = vmatpush2.msra.mxu0 0.0
    %690 = vmatprep.subr.mxu0 0.0
    %691 = vmatpush2.msra.mxu0 0.0
    %692 = vmatprep.mubr.f32.mxu0 0.0
    %693 = vmatmul.mubr.f32.gmra.mxu0 %v621
    %v694 = vpop.f32.mrf.mxu0
    %v695 = vadd.f32 0.0, %v694
    %v696 = vpop.f32.mrf.mxu0
    %v697 = vadd.f32 0.0, %v696
    %698 = vdwg.mxu0
    %699 = vmatprep.subr.mxu0 0.0
    %700 = vmatpush1.msra.mxu0 %v110
    %701 = vmatprep.subr.mxu0 0.0
    %702 = vmatpush1.msra.mxu0 %v107
    %703 = vmatprep.subr.mxu0 0.0
    %704 = vmatpush1.msra.mxu0 %v104
    %705 = vmatprep.subr.mxu0 0.0
    %706 = vmatpush1.msra.mxu0 %v101
    %707 = vmatprep.subr.mxu0 0.0
    %708 = vmatpush1.msra.mxu0 %v98
    %709 = vmatprep.subr.mxu0 0.0
    %710 = vmatpush1.msra.mxu0 %v95
    %711 = vmatprep.subr.mxu0 0.0
    %712 = vmatpush1.msra.mxu0 %v92
    %713 = vmatprep.subr.mxu0 0.0
    %714 = vmatpush1.msra.mxu0 %v89
    %715 = vmatprep.subr.mxu0 0.0
    %716 = vmatpush1.msra.mxu0 %v86
    %717 = vmatprep.subr.mxu0 0.0
    %718 = vmatpush1.msra.mxu0 %v83
    %719 = vmatprep.subr.mxu0 0.0
    %720 = vmatpush1.msra.mxu0 %v80
    %721 = vmatprep.subr.mxu0 0.0
    %722 = vmatpush1.msra.mxu0 %v77
    %723 = vmatprep.subr.mxu0 0.0
    %724 = vmatpush1.msra.mxu0 %v74
    %725 = vmatprep.subr.mxu0 0.0
    %726 = vmatpush1.msra.mxu0 %v71
    %727 = vmatprep.subr.mxu0 0.0
    %728 = vmatpush1.msra.mxu0 %v68
    %729 = vmatprep.subr.mxu0 0.0
    %730 = vmatpush1.msra.mxu0 %v65
    %731 = vmatprep.subr.mxu0 0.0
    %732 = vmatpush2.msra.mxu0 0.0
    %733 = vmatprep.subr.mxu0 0.0
    %734 = vmatpush2.msra.mxu0 0.0
    %735 = vmatprep.subr.mxu0 0.0
    %736 = vmatpush2.msra.mxu0 0.0
    %737 = vmatprep.subr.mxu0 0.0
    %738 = vmatpush2.msra.mxu0 0.0
    %739 = vmatprep.subr.mxu0 0.0
    %740 = vmatpush2.msra.mxu0 0.0
    %741 = vmatprep.subr.mxu0 0.0
    %742 = vmatpush2.msra.mxu0 0.0
    %743 = vmatprep.subr.mxu0 0.0
    %744 = vmatpush2.msra.mxu0 0.0
    %745 = vmatprep.subr.mxu0 0.0
    %746 = vmatpush2.msra.mxu0 0.0
    %747 = vmatprep.subr.mxu0 0.0
    %748 = vmatpush2.msra.mxu0 0.0
    %749 = vmatprep.subr.mxu0 0.0
    %750 = vmatpush2.msra.mxu0 0.0
    %751 = vmatprep.subr.mxu0 0.0
    %752 = vmatpush2.msra.mxu0 0.0
    %753 = vmatprep.subr.mxu0 0.0
    %754 = vmatpush2.msra.mxu0 0.0
    %755 = vmatprep.subr.mxu0 0.0
    %756 = vmatpush2.msra.mxu0 0.0
    %757 = vmatprep.subr.mxu0 0.0
    %758 = vmatpush2.msra.mxu0 0.0
    %759 = vmatprep.subr.mxu0 0.0
    %760 = vmatpush2.msra.mxu0 0.0
    %761 = vmatprep.subr.mxu0 0.0
    %762 = vmatpush2.msra.mxu0 0.0
    %763 = vmatprep.mubr.f32.mxu0 0.0
    %764 = vmatmul.mubr.f32.gmra.mxu0 %v621
    %v765 = vpop.f32.mrf.mxu0
    %v766 = vadd.f32 0.0, %v765
    %v767 = vpop.f32.mrf.mxu0
    %768 = vdwg.mxu0
    %v769 = vadd.f32 %v625, %v695
    %v770 = vxor.u32 %v769, 2147483648
    %v771 = vmul.f32 %v770, 1.442695
    %v772 = vpow.pop %v771
    %v773 = vadd.f32 %v772, 1.0
    %v774 = vrcp.pop %v773
    %v775 = vmul.f32 1.0, %v774
    %v776 = vadd.f32 %v626, %v697
    %v777 = vxor.u32 %v776, 2147483648
    %v778 = vmul.f32 %v777, 1.442695
    %v779 = vpow.pop %v778
    %v780 = vadd.f32 %v779, 1.0
    %v781 = vrcp.pop %v780
    %v782 = vmul.f32 1.0, %v781
    %v783 = vadd.f32 %v766, %v275
    %v784 = vmul.f32 %v775, %v783
    %v785 = vadd.f32 %v627, %v784
    %v786 = vtanh.pop %v785
    %v787 = vsub.f32 1.0, %v782
    %v788 = vmul.f32 %v787, %v786
    %v789 = vmul.f32 %v782, %v621
    %v790 = vadd.f32 %v788, %v789
    %s791 = scalar_lea.vmem [#allocation9], 24
    %792 = vst [vmem:[%s791] sm:$0xff] %v790
    %s793 = scalar_lea.vmem [#allocation3], 96
    %v794 = vld [vmem:[%s793] sm:$0xff]
    %v795 = vld [vmem:[%s793 + $0x8] sm:$0xff]
    %v796 = vld [vmem:[%s793 + $0x10] sm:$0xff]
    %797 = vmatprep.subr.mxu0 %v109
    %798 = vmatpush1.msra.mxu0 %v108
    %799 = vmatprep.subr.mxu0 %v106
    %800 = vmatpush1.msra.mxu0 %v105
    %801 = vmatprep.subr.mxu0 %v103
    %802 = vmatpush1.msra.mxu0 %v102
    %803 = vmatprep.subr.mxu0 %v100
    %804 = vmatpush1.msra.mxu0 %v99
    %805 = vmatprep.subr.mxu0 %v97
    %806 = vmatpush1.msra.mxu0 %v96
    %807 = vmatprep.subr.mxu0 %v94
    %808 = vmatpush1.msra.mxu0 %v93
    %809 = vmatprep.subr.mxu0 %v91
    %810 = vmatpush1.msra.mxu0 %v90
    %811 = vmatprep.subr.mxu0 %v88
    %812 = vmatpush1.msra.mxu0 %v87
    %813 = vmatprep.subr.mxu0 %v85
    %814 = vmatpush1.msra.mxu0 %v84
    %815 = vmatprep.subr.mxu0 %v82
    %816 = vmatpush1.msra.mxu0 %v81
    %817 = vmatprep.subr.mxu0 %v79
    %818 = vmatpush1.msra.mxu0 %v78
    %819 = vmatprep.subr.mxu0 %v76
    %820 = vmatpush1.msra.mxu0 %v75
    %821 = vmatprep.subr.mxu0 %v73
    %822 = vmatpush1.msra.mxu0 %v72
    %823 = vmatprep.subr.mxu0 %v70
    %824 = vmatpush1.msra.mxu0 %v69
    %825 = vmatprep.subr.mxu0 %v67
    %826 = vmatpush1.msra.mxu0 %v66
    %827 = vmatprep.subr.mxu0 %v64
    %828 = vmatpush1.msra.mxu0 %v63
    %829 = vmatprep.subr.mxu0 0.0
    %830 = vmatpush2.msra.mxu0 0.0
    %831 = vmatprep.subr.mxu0 0.0
    %832 = vmatpush2.msra.mxu0 0.0
    %833 = vmatprep.subr.mxu0 0.0
    %834 = vmatpush2.msra.mxu0 0.0
    %835 = vmatprep.subr.mxu0 0.0
    %836 = vmatpush2.msra.mxu0 0.0
    %837 = vmatprep.subr.mxu0 0.0
    %838 = vmatpush2.msra.mxu0 0.0
    %839 = vmatprep.subr.mxu0 0.0
    %840 = vmatpush2.msra.mxu0 0.0
    %841 = vmatprep.subr.mxu0 0.0
    %842 = vmatpush2.msra.mxu0 0.0
    %843 = vmatprep.subr.mxu0 0.0
    %844 = vmatpush2.msra.mxu0 0.0
    %845 = vmatprep.subr.mxu0 0.0
    %846 = vmatpush2.msra.mxu0 0.0
    %847 = vmatprep.subr.mxu0 0.0
    %848 = vmatpush2.msra.mxu0 0.0
    %849 = vmatprep.subr.mxu0 0.0
    %850 = vmatpush2.msra.mxu0 0.0
    %851 = vmatprep.subr.mxu0 0.0
    %852 = vmatpush2.msra.mxu0 0.0
    %853 = vmatprep.subr.mxu0 0.0
    %854 = vmatpush2.msra.mxu0 0.0
    %855 = vmatprep.subr.mxu0 0.0
    %856 = vmatpush2.msra.mxu0 0.0
    %857 = vmatprep.subr.mxu0 0.0
    %858 = vmatpush2.msra.mxu0 0.0
    %859 = vmatprep.subr.mxu0 0.0
    %860 = vmatpush2.msra.mxu0 0.0
    %861 = vmatprep.mubr.f32.mxu0 0.0
    %862 = vmatmul.mubr.f32.gmra.mxu0 %v790
    %v863 = vpop.f32.mrf.mxu0
    %v864 = vadd.f32 0.0, %v863
    %v865 = vpop.f32.mrf.mxu0
    %v866 = vadd.f32 0.0, %v865
    %867 = vdwg.mxu0
    %868 = vmatprep.subr.mxu0 0.0
    %869 = vmatpush1.msra.mxu0 %v110
    %870 = vmatprep.subr.mxu0 0.0
    %871 = vmatpush1.msra.mxu0 %v107
    %872 = vmatprep.subr.mxu0 0.0
    %873 = vmatpush1.msra.mxu0 %v104
    %874 = vmatprep.subr.mxu0 0.0
    %875 = vmatpush1.msra.mxu0 %v101
    %876 = vmatprep.subr.mxu0 0.0
    %877 = vmatpush1.msra.mxu0 %v98
    %878 = vmatprep.subr.mxu0 0.0
    %879 = vmatpush1.msra.mxu0 %v95
    %880 = vmatprep.subr.mxu0 0.0
    %881 = vmatpush1.msra.mxu0 %v92
    %882 = vmatprep.subr.mxu0 0.0
    %883 = vmatpush1.msra.mxu0 %v89
    %884 = vmatprep.subr.mxu0 0.0
    %885 = vmatpush1.msra.mxu0 %v86
    %886 = vmatprep.subr.mxu0 0.0
    %887 = vmatpush1.msra.mxu0 %v83
    %888 = vmatprep.subr.mxu0 0.0
    %889 = vmatpush1.msra.mxu0 %v80
    %890 = vmatprep.subr.mxu0 0.0
    %891 = vmatpush1.msra.mxu0 %v77
    %892 = vmatprep.subr.mxu0 0.0
    %893 = vmatpush1.msra.mxu0 %v74
    %894 = vmatprep.subr.mxu0 0.0
    %895 = vmatpush1.msra.mxu0 %v71
    %896 = vmatprep.subr.mxu0 0.0
    %897 = vmatpush1.msra.mxu0 %v68
    %898 = vmatprep.subr.mxu0 0.0
    %899 = vmatpush1.msra.mxu0 %v65
    %900 = vmatprep.subr.mxu0 0.0
    %901 = vmatpush2.msra.mxu0 0.0
    %902 = vmatprep.subr.mxu0 0.0
    %903 = vmatpush2.msra.mxu0 0.0
    %904 = vmatprep.subr.mxu0 0.0
    %905 = vmatpush2.msra.mxu0 0.0
    %906 = vmatprep.subr.mxu0 0.0
    %907 = vmatpush2.msra.mxu0 0.0
    %908 = vmatprep.subr.mxu0 0.0
    %909 = vmatpush2.msra.mxu0 0.0
    %910 = vmatprep.subr.mxu0 0.0
    %911 = vmatpush2.msra.mxu0 0.0
    %912 = vmatprep.subr.mxu0 0.0
    %913 = vmatpush2.msra.mxu0 0.0
    %914 = vmatprep.subr.mxu0 0.0
    %915 = vmatpush2.msra.mxu0 0.0
    %916 = vmatprep.subr.mxu0 0.0
    %917 = vmatpush2.msra.mxu0 0.0
    %918 = vmatprep.subr.mxu0 0.0
    %919 = vmatpush2.msra.mxu0 0.0
    %920 = vmatprep.subr.mxu0 0.0
    %921 = vmatpush2.msra.mxu0 0.0
    %922 = vmatprep.subr.mxu0 0.0
    %923 = vmatpush2.msra.mxu0 0.0
    %924 = vmatprep.subr.mxu0 0.0
    %925 = vmatpush2.msra.mxu0 0.0
    %926 = vmatprep.subr.mxu0 0.0
    %927 = vmatpush2.msra.mxu0 0.0
    %928 = vmatprep.subr.mxu0 0.0
    %929 = vmatpush2.msra.mxu0 0.0
    %930 = vmatprep.subr.mxu0 0.0
    %931 = vmatpush2.msra.mxu0 0.0
    %932 = vmatprep.mubr.f32.mxu0 0.0
    %933 = vmatmul.mubr.f32.gmra.mxu0 %v790
    %v934 = vpop.f32.mrf.mxu0
    %v935 = vadd.f32 0.0, %v934
    %v936 = vpop.f32.mrf.mxu0
    %937 = vdwg.mxu0
    %v938 = vadd.f32 %v794, %v864
    %v939 = vxor.u32 %v938, 2147483648
    %v940 = vmul.f32 %v939, 1.442695
    %v941 = vpow.pop %v940
    %v942 = vadd.f32 %v941, 1.0
    %v943 = vrcp.pop %v942
    %v944 = vmul.f32 1.0, %v943
    %v945 = vadd.f32 %v795, %v866
    %v946 = vxor.u32 %v945, 2147483648
    %v947 = vmul.f32 %v946, 1.442695
    %v948 = vpow.pop %v947
    %v949 = vadd.f32 %v948, 1.0
    %v950 = vrcp.pop %v949
    %v951 = vmul.f32 1.0, %v950
    %v952 = vadd.f32 %v935, %v275
    %v953 = vmul.f32 %v944, %v952
    %v954 = vadd.f32 %v796, %v953
    %v955 = vtanh.pop %v954
    %v956 = vsub.f32 1.0, %v951
    %v957 = vmul.f32 %v956, %v955
    %v958 = vmul.f32 %v951, %v790
    %v959 = vadd.f32 %v957, %v958
    %s960 = scalar_lea.vmem [#allocation9], 32
    %961 = vst [vmem:[%s960] sm:$0xff] %v959
    %s962 = scalar_lea.vmem [#allocation3], 120
    %v963 = vld [vmem:[%s962] sm:$0xff]
    %v964 = vld [vmem:[%s962 + $0x8] sm:$0xff]
    %v965 = vld [vmem:[%s962 + $0x10] sm:$0xff]
    %966 = vmatprep.subr.mxu0 %v109
    %967 = vmatpush1.msra.mxu0 %v108
    %968 = vmatprep.subr.mxu0 %v106
    %969 = vmatpush1.msra.mxu0 %v105
    %970 = vmatprep.subr.mxu0 %v103
    %971 = vmatpush1.msra.mxu0 %v102
    %972 = vmatprep.subr.mxu0 %v100
    %973 = vmatpush1.msra.mxu0 %v99
    %974 = vmatprep.subr.mxu0 %v97
    %975 = vmatpush1.msra.mxu0 %v96
    %976 = vmatprep.subr.mxu0 %v94
    %977 = vmatpush1.msra.mxu0 %v93
    %978 = vmatprep.subr.mxu0 %v91
    %979 = vmatpush1.msra.mxu0 %v90
    %980 = vmatprep.subr.mxu0 %v88
    %981 = vmatpush1.msra.mxu0 %v87
    %982 = vmatprep.subr.mxu0 %v85
    %983 = vmatpush1.msra.mxu0 %v84
    %984 = vmatprep.subr.mxu0 %v82
    %985 = vmatpush1.msra.mxu0 %v81
    %986 = vmatprep.subr.mxu0 %v79
    %987 = vmatpush1.msra.mxu0 %v78
    %988 = vmatprep.subr.mxu0 %v76
    %989 = vmatpush1.msra.mxu0 %v75
    %990 = vmatprep.subr.mxu0 %v73
    %991 = vmatpush1.msra.mxu0 %v72
    %992 = vmatprep.subr.mxu0 %v70
    %993 = vmatpush1.msra.mxu0 %v69
    %994 = vmatprep.subr.mxu0 %v67
    %995 = vmatpush1.msra.mxu0 %v66
    %996 = vmatprep.subr.mxu0 %v64
    %997 = vmatpush1.msra.mxu0 %v63
    %998 = vmatprep.subr.mxu0 0.0
    %999 = vmatpush2.msra.mxu0 0.0
    %1000 = vmatprep.subr.mxu0 0.0
    %1001 = vmatpush2.msra.mxu0 0.0
    %1002 = vmatprep.subr.mxu0 0.0
    %1003 = vmatpush2.msra.mxu0 0.0
    %1004 = vmatprep.subr.mxu0 0.0
    %1005 = vmatpush2.msra.mxu0 0.0
    %1006 = vmatprep.subr.mxu0 0.0
    %1007 = vmatpush2.msra.mxu0 0.0
    %1008 = vmatprep.subr.mxu0 0.0
    %1009 = vmatpush2.msra.mxu0 0.0
    %1010 = vmatprep.subr.mxu0 0.0
    %1011 = vmatpush2.msra.mxu0 0.0
    %1012 = vmatprep.subr.mxu0 0.0
    %1013 = vmatpush2.msra.mxu0 0.0
    %1014 = vmatprep.subr.mxu0 0.0
    %1015 = vmatpush2.msra.mxu0 0.0
    %1016 = vmatprep.subr.mxu0 0.0
    %1017 = vmatpush2.msra.mxu0 0.0
    %1018 = vmatprep.subr.mxu0 0.0
    %1019 = vmatpush2.msra.mxu0 0.0
    %1020 = vmatprep.subr.mxu0 0.0
    %1021 = vmatpush2.msra.mxu0 0.0
    %1022 = vmatprep.subr.mxu0 0.0
    %1023 = vmatpush2.msra.mxu0 0.0
    %1024 = vmatprep.subr.mxu0 0.0
    %1025 = vmatpush2.msra.mxu0 0.0
    %1026 = vmatprep.subr.mxu0 0.0
    %1027 = vmatpush2.msra.mxu0 0.0
    %1028 = vmatprep.subr.mxu0 0.0
    %1029 = vmatpush2.msra.mxu0 0.0
    %1030 = vmatprep.mubr.f32.mxu0 0.0
    %1031 = vmatmul.mubr.f32.gmra.mxu0 %v959
    %v1032 = vpop.f32.mrf.mxu0
    %v1033 = vadd.f32 0.0, %v1032
    %v1034 = vpop.f32.mrf.mxu0
    %v1035 = vadd.f32 0.0, %v1034
    %1036 = vdwg.mxu0
    %1037 = vmatprep.subr.mxu0 0.0
    %1038 = vmatpush1.msra.mxu0 %v110
    %1039 = vmatprep.subr.mxu0 0.0
    %1040 = vmatpush1.msra.mxu0 %v107
    %1041 = vmatprep.subr.mxu0 0.0
    %1042 = vmatpush1.msra.mxu0 %v104
    %1043 = vmatprep.subr.mxu0 0.0
    %1044 = vmatpush1.msra.mxu0 %v101
    %1045 = vmatprep.subr.mxu0 0.0
    %1046 = vmatpush1.msra.mxu0 %v98
    %1047 = vmatprep.subr.mxu0 0.0
    %1048 = vmatpush1.msra.mxu0 %v95
    %1049 = vmatprep.subr.mxu0 0.0
    %1050 = vmatpush1.msra.mxu0 %v92
    %1051 = vmatprep.subr.mxu0 0.0
    %1052 = vmatpush1.msra.mxu0 %v89
    %1053 = vmatprep.subr.mxu0 0.0
    %1054 = vmatpush1.msra.mxu0 %v86
    %1055 = vmatprep.subr.mxu0 0.0
    %1056 = vmatpush1.msra.mxu0 %v83
    %1057 = vmatprep.subr.mxu0 0.0
    %1058 = vmatpush1.msra.mxu0 %v80
    %1059 = vmatprep.subr.mxu0 0.0
    %1060 = vmatpush1.msra.mxu0 %v77
    %1061 = vmatprep.subr.mxu0 0.0
    %1062 = vmatpush1.msra.mxu0 %v74
    %1063 = vmatprep.subr.mxu0 0.0
    %1064 = vmatpush1.msra.mxu0 %v71
    %1065 = vmatprep.subr.mxu0 0.0
    %1066 = vmatpush1.msra.mxu0 %v68
    %1067 = vmatprep.subr.mxu0 0.0
    %1068 = vmatpush1.msra.mxu0 %v65
    %1069 = vmatprep.subr.mxu0 0.0
    %1070 = vmatpush2.msra.mxu0 0.0
    %1071 = vmatprep.subr.mxu0 0.0
    %1072 = vmatpush2.msra.mxu0 0.0
    %1073 = vmatprep.subr.mxu0 0.0
    %1074 = vmatpush2.msra.mxu0 0.0
    %1075 = vmatprep.subr.mxu0 0.0
    %1076 = vmatpush2.msra.mxu0 0.0
    %1077 = vmatprep.subr.mxu0 0.0
    %1078 = vmatpush2.msra.mxu0 0.0
    %1079 = vmatprep.subr.mxu0 0.0
    %1080 = vmatpush2.msra.mxu0 0.0
    %1081 = vmatprep.subr.mxu0 0.0
    %1082 = vmatpush2.msra.mxu0 0.0
    %1083 = vmatprep.subr.mxu0 0.0
    %1084 = vmatpush2.msra.mxu0 0.0
    %1085 = vmatprep.subr.mxu0 0.0
    %1086 = vmatpush2.msra.mxu0 0.0
    %1087 = vmatprep.subr.mxu0 0.0
    %1088 = vmatpush2.msra.mxu0 0.0
    %1089 = vmatprep.subr.mxu0 0.0
    %1090 = vmatpush2.msra.mxu0 0.0
    %1091 = vmatprep.subr.mxu0 0.0
    %1092 = vmatpush2.msra.mxu0 0.0
    %1093 = vmatprep.subr.mxu0 0.0
    %1094 = vmatpush2.msra.mxu0 0.0
    %1095 = vmatprep.subr.mxu0 0.0
    %1096 = vmatpush2.msra.mxu0 0.0
    %1097 = vmatprep.subr.mxu0 0.0
    %1098 = vmatpush2.msra.mxu0 0.0
    %1099 = vmatprep.subr.mxu0 0.0
    %1100 = vmatpush2.msra.mxu0 0.0
    %1101 = vmatprep.mubr.f32.mxu0 0.0
    %1102 = vmatmul.mubr.f32.gmra.mxu0 %v959
    %v1103 = vpop.f32.mrf.mxu0
    %v1104 = vadd.f32 0.0, %v1103
    %v1105 = vpop.f32.mrf.mxu0
    %1106 = vdwg.mxu0
    %v1107 = vadd.f32 %v963, %v1033
    %v1108 = vxor.u32 %v1107, 2147483648
    %v1109 = vmul.f32 %v1108, 1.442695
    %v1110 = vpow.pop %v1109
    %v1111 = vadd.f32 %v1110, 1.0
    %v1112 = vrcp.pop %v1111
    %v1113 = vmul.f32 1.0, %v1112
    %v1114 = vadd.f32 %v964, %v1035
    %v1115 = vxor.u32 %v1114, 2147483648
    %v1116 = vmul.f32 %v1115, 1.442695
    %v1117 = vpow.pop %v1116
    %v1118 = vadd.f32 %v1117, 1.0
    %v1119 = vrcp.pop %v1118
    %v1120 = vmul.f32 1.0, %v1119
    %v1121 = vadd.f32 %v1104, %v275
    %v1122 = vmul.f32 %v1113, %v1121
    %v1123 = vadd.f32 %v965, %v1122
    %v1124 = vtanh.pop %v1123
    %v1125 = vsub.f32 1.0, %v1120
    %v1126 = vmul.f32 %v1125, %v1124
    %v1127 = vmul.f32 %v1120, %v959
    %v1128 = vadd.f32 %v1126, %v1127
    %s1129 = scalar_lea.vmem [#allocation9], 40
    %1130 = vst [vmem:[%s1129] sm:$0xff] %v1128
    %s1131 = scalar_lea.vmem [#allocation3], 144
    %v1132 = vld [vmem:[%s1131] sm:$0xff]
    %v1133 = vld [vmem:[%s1131 + $0x8] sm:$0xff]
    %v1134 = vld [vmem:[%s1131 + $0x10] sm:$0xff]
    %1135 = vmatprep.subr.mxu0 %v109
    %1136 = vmatpush1.msra.mxu0 %v108
    %1137 = vmatprep.subr.mxu0 %v106
    %1138 = vmatpush1.msra.mxu0 %v105
    %1139 = vmatprep.subr.mxu0 %v103
    %1140 = vmatpush1.msra.mxu0 %v102
    %1141 = vmatprep.subr.mxu0 %v100
    %1142 = vmatpush1.msra.mxu0 %v99
    %1143 = vmatprep.subr.mxu0 %v97
    %1144 = vmatpush1.msra.mxu0 %v96
    %1145 = vmatprep.subr.mxu0 %v94
    %1146 = vmatpush1.msra.mxu0 %v93
    %1147 = vmatprep.subr.mxu0 %v91
    %1148 = vmatpush1.msra.mxu0 %v90
    %1149 = vmatprep.subr.mxu0 %v88
    %1150 = vmatpush1.msra.mxu0 %v87
    %1151 = vmatprep.subr.mxu0 %v85
    %1152 = vmatpush1.msra.mxu0 %v84
    %1153 = vmatprep.subr.mxu0 %v82
    %1154 = vmatpush1.msra.mxu0 %v81
    %1155 = vmatprep.subr.mxu0 %v79
    %1156 = vmatpush1.msra.mxu0 %v78
    %1157 = vmatprep.subr.mxu0 %v76
    %1158 = vmatpush1.msra.mxu0 %v75
    %1159 = vmatprep.subr.mxu0 %v73
    %1160 = vmatpush1.msra.mxu0 %v72
    %1161 = vmatprep.subr.mxu0 %v70
    %1162 = vmatpush1.msra.mxu0 %v69
    %1163 = vmatprep.subr.mxu0 %v67
    %1164 = vmatpush1.msra.mxu0 %v66
    %1165 = vmatprep.subr.mxu0 %v64
    %1166 = vmatpush1.msra.mxu0 %v63
    %1167 = vmatprep.subr.mxu0 0.0
    %1168 = vmatpush2.msra.mxu0 0.0
    %1169 = vmatprep.subr.mxu0 0.0
    %1170 = vmatpush2.msra.mxu0 0.0
    %1171 = vmatprep.subr.mxu0 0.0
    %1172 = vmatpush2.msra.mxu0 0.0
    %1173 = vmatprep.subr.mxu0 0.0
    %1174 = vmatpush2.msra.mxu0 0.0
    %1175 = vmatprep.subr.mxu0 0.0
    %1176 = vmatpush2.msra.mxu0 0.0
    %1177 = vmatprep.subr.mxu0 0.0
    %1178 = vmatpush2.msra.mxu0 0.0
    %1179 = vmatprep.subr.mxu0 0.0
    %1180 = vmatpush2.msra.mxu0 0.0
    %1181 = vmatprep.subr.mxu0 0.0
    %1182 = vmatpush2.msra.mxu0 0.0
    %1183 = vmatprep.subr.mxu0 0.0
    %1184 = vmatpush2.msra.mxu0 0.0
    %1185 = vmatprep.subr.mxu0 0.0
    %1186 = vmatpush2.msra.mxu0 0.0
    %1187 = vmatprep.subr.mxu0 0.0
    %1188 = vmatpush2.msra.mxu0 0.0
    %1189 = vmatprep.subr.mxu0 0.0
    %1190 = vmatpush2.msra.mxu0 0.0
    %1191 = vmatprep.subr.mxu0 0.0
    %1192 = vmatpush2.msra.mxu0 0.0
    %1193 = vmatprep.subr.mxu0 0.0
    %1194 = vmatpush2.msra.mxu0 0.0
    %1195 = vmatprep.subr.mxu0 0.0
    %1196 = vmatpush2.msra.mxu0 0.0
    %1197 = vmatprep.subr.mxu0 0.0
    %1198 = vmatpush2.msra.mxu0 0.0
    %1199 = vmatprep.mubr.f32.mxu0 0.0
    %1200 = vmatmul.mubr.f32.gmra.mxu0 %v1128
    %v1201 = vpop.f32.mrf.mxu0
    %v1202 = vadd.f32 0.0, %v1201
    %v1203 = vpop.f32.mrf.mxu0
    %v1204 = vadd.f32 0.0, %v1203
    %1205 = vdwg.mxu0
    %1206 = vmatprep.subr.mxu0 0.0
    %1207 = vmatpush1.msra.mxu0 %v110
    %1208 = vmatprep.subr.mxu0 0.0
    %1209 = vmatpush1.msra.mxu0 %v107
    %1210 = vmatprep.subr.mxu0 0.0
    %1211 = vmatpush1.msra.mxu0 %v104
    %1212 = vmatprep.subr.mxu0 0.0
    %1213 = vmatpush1.msra.mxu0 %v101
    %1214 = vmatprep.subr.mxu0 0.0
    %1215 = vmatpush1.msra.mxu0 %v98
    %1216 = vmatprep.subr.mxu0 0.0
    %1217 = vmatpush1.msra.mxu0 %v95
    %1218 = vmatprep.subr.mxu0 0.0
    %1219 = vmatpush1.msra.mxu0 %v92
    %1220 = vmatprep.subr.mxu0 0.0
    %1221 = vmatpush1.msra.mxu0 %v89
    %1222 = vmatprep.subr.mxu0 0.0
    %1223 = vmatpush1.msra.mxu0 %v86
    %1224 = vmatprep.subr.mxu0 0.0
    %1225 = vmatpush1.msra.mxu0 %v83
    %1226 = vmatprep.subr.mxu0 0.0
    %1227 = vmatpush1.msra.mxu0 %v80
    %1228 = vmatprep.subr.mxu0 0.0
    %1229 = vmatpush1.msra.mxu0 %v77
    %1230 = vmatprep.subr.mxu0 0.0
    %1231 = vmatpush1.msra.mxu0 %v74
    %1232 = vmatprep.subr.mxu0 0.0
    %1233 = vmatpush1.msra.mxu0 %v71
    %1234 = vmatprep.subr.mxu0 0.0
    %1235 = vmatpush1.msra.mxu0 %v68
    %1236 = vmatprep.subr.mxu0 0.0
    %1237 = vmatpush1.msra.mxu0 %v65
    %1238 = vmatprep.subr.mxu0 0.0
    %1239 = vmatpush2.msra.mxu0 0.0
    %1240 = vmatprep.subr.mxu0 0.0
    %1241 = vmatpush2.msra.mxu0 0.0
    %1242 = vmatprep.subr.mxu0 0.0
    %1243 = vmatpush2.msra.mxu0 0.0
    %1244 = vmatprep.subr.mxu0 0.0
    %1245 = vmatpush2.msra.mxu0 0.0
    %1246 = vmatprep.subr.mxu0 0.0
    %1247 = vmatpush2.msra.mxu0 0.0
    %1248 = vmatprep.subr.mxu0 0.0
    %1249 = vmatpush2.msra.mxu0 0.0
    %1250 = vmatprep.subr.mxu0 0.0
    %1251 = vmatpush2.msra.mxu0 0.0
    %1252 = vmatprep.subr.mxu0 0.0
    %1253 = vmatpush2.msra.mxu0 0.0
    %1254 = vmatprep.subr.mxu0 0.0
    %1255 = vmatpush2.msra.mxu0 0.0
    %1256 = vmatprep.subr.mxu0 0.0
    %1257 = vmatpush2.msra.mxu0 0.0
    %1258 = vmatprep.subr.mxu0 0.0
    %1259 = vmatpush2.msra.mxu0 0.0
    %1260 = vmatprep.subr.mxu0 0.0
    %1261 = vmatpush2.msra.mxu0 0.0
    %1262 = vmatprep.subr.mxu0 0.0
    %1263 = vmatpush2.msra.mxu0 0.0
    %1264 = vmatprep.subr.mxu0 0.0
    %1265 = vmatpush2.msra.mxu0 0.0
    %1266 = vmatprep.subr.mxu0 0.0
    %1267 = vmatpush2.msra.mxu0 0.0
    %1268 = vmatprep.subr.mxu0 0.0
    %1269 = vmatpush2.msra.mxu0 0.0
    %1270 = vmatprep.mubr.f32.mxu0 0.0
    %1271 = vmatmul.mubr.f32.gmra.mxu0 %v1128
    %v1272 = vpop.f32.mrf.mxu0
    %v1273 = vadd.f32 0.0, %v1272
    %v1274 = vpop.f32.mrf.mxu0
    %1275 = vdwg.mxu0
    %v1276 = vadd.f32 %v1132, %v1202
    %v1277 = vxor.u32 %v1276, 2147483648
    %v1278 = vmul.f32 %v1277, 1.442695
    %v1279 = vpow.pop %v1278
    %v1280 = vadd.f32 %v1279, 1.0
    %v1281 = vrcp.pop %v1280
    %v1282 = vmul.f32 1.0, %v1281
    %v1283 = vadd.f32 %v1133, %v1204
    %v1284 = vxor.u32 %v1283, 2147483648
    %v1285 = vmul.f32 %v1284, 1.442695
    %v1286 = vpow.pop %v1285
    %v1287 = vadd.f32 %v1286, 1.0
    %v1288 = vrcp.pop %v1287
    %v1289 = vmul.f32 1.0, %v1288
    %v1290 = vadd.f32 %v1273, %v275
    %v1291 = vmul.f32 %v1282, %v1290
    %v1292 = vadd.f32 %v1134, %v1291
    %v1293 = vtanh.pop %v1292
    %v1294 = vsub.f32 1.0, %v1289
    %v1295 = vmul.f32 %v1294, %v1293
    %v1296 = vmul.f32 %v1289, %v1128
    %v1297 = vadd.f32 %v1295, %v1296
    %s1298 = scalar_lea.vmem [#allocation9], 48
    %1299 = vst [vmem:[%s1298] sm:$0xff] %v1297
    %s1300 = scalar_lea.vmem [#allocation3], 168
    %v1301 = vld [vmem:[%s1300] sm:$0xff]
    %v1302 = vld [vmem:[%s1300 + $0x8] sm:$0xff]
    %v1303 = vld [vmem:[%s1300 + $0x10] sm:$0xff]
    %1304 = vmatprep.subr.mxu0 %v109
    %1305 = vmatpush1.msra.mxu0 %v108
    %1306 = vmatprep.subr.mxu0 %v106
    %1307 = vmatpush1.msra.mxu0 %v105
    %1308 = vmatprep.subr.mxu0 %v103
    %1309 = vmatpush1.msra.mxu0 %v102
    %1310 = vmatprep.subr.mxu0 %v100
    %1311 = vmatpush1.msra.mxu0 %v99
    %1312 = vmatprep.subr.mxu0 %v97
    %1313 = vmatpush1.msra.mxu0 %v96
    %1314 = vmatprep.subr.mxu0 %v94
    %1315 = vmatpush1.msra.mxu0 %v93
    %1316 = vmatprep.subr.mxu0 %v91
    %1317 = vmatpush1.msra.mxu0 %v90
    %1318 = vmatprep.subr.mxu0 %v88
    %1319 = vmatpush1.msra.mxu0 %v87
    %1320 = vmatprep.subr.mxu0 %v85
    %1321 = vmatpush1.msra.mxu0 %v84
    %1322 = vmatprep.subr.mxu0 %v82
    %1323 = vmatpush1.msra.mxu0 %v81
    %1324 = vmatprep.subr.mxu0 %v79
    %1325 = vmatpush1.msra.mxu0 %v78
    %1326 = vmatprep.subr.mxu0 %v76
    %1327 = vmatpush1.msra.mxu0 %v75
    %1328 = vmatprep.subr.mxu0 %v73
    %1329 = vmatpush1.msra.mxu0 %v72
    %1330 = vmatprep.subr.mxu0 %v70
    %1331 = vmatpush1.msra.mxu0 %v69
    %1332 = vmatprep.subr.mxu0 %v67
    %1333 = vmatpush1.msra.mxu0 %v66
    %1334 = vmatprep.subr.mxu0 %v64
    %1335 = vmatpush1.msra.mxu0 %v63
    %1336 = vmatprep.subr.mxu0 0.0
    %1337 = vmatpush2.msra.mxu0 0.0
    %1338 = vmatprep.subr.mxu0 0.0
    %1339 = vmatpush2.msra.mxu0 0.0
    %1340 = vmatprep.subr.mxu0 0.0
    %1341 = vmatpush2.msra.mxu0 0.0
    %1342 = vmatprep.subr.mxu0 0.0
    %1343 = vmatpush2.msra.mxu0 0.0
    %1344 = vmatprep.subr.mxu0 0.0
    %1345 = vmatpush2.msra.mxu0 0.0
    %1346 = vmatprep.subr.mxu0 0.0
    %1347 = vmatpush2.msra.mxu0 0.0
    %1348 = vmatprep.subr.mxu0 0.0
    %1349 = vmatpush2.msra.mxu0 0.0
    %1350 = vmatprep.subr.mxu0 0.0
    %1351 = vmatpush2.msra.mxu0 0.0
    %1352 = vmatprep.subr.mxu0 0.0
    %1353 = vmatpush2.msra.mxu0 0.0
    %1354 = vmatprep.subr.mxu0 0.0
    %1355 = vmatpush2.msra.mxu0 0.0
    %1356 = vmatprep.subr.mxu0 0.0
    %1357 = vmatpush2.msra.mxu0 0.0
    %1358 = vmatprep.subr.mxu0 0.0
    %1359 = vmatpush2.msra.mxu0 0.0
    %1360 = vmatprep.subr.mxu0 0.0
    %1361 = vmatpush2.msra.mxu0 0.0
    %1362 = vmatprep.subr.mxu0 0.0
    %1363 = vmatpush2.msra.mxu0 0.0
    %1364 = vmatprep.subr.mxu0 0.0
    %1365 = vmatpush2.msra.mxu0 0.0
    %1366 = vmatprep.subr.mxu0 0.0
    %1367 = vmatpush2.msra.mxu0 0.0
    %1368 = vmatprep.mubr.f32.mxu0 0.0
    %1369 = vmatmul.mubr.f32.gmra.mxu0 %v1297
    %v1370 = vpop.f32.mrf.mxu0
    %v1371 = vadd.f32 0.0, %v1370
    %v1372 = vpop.f32.mrf.mxu0
    %v1373 = vadd.f32 0.0, %v1372
    %1374 = vdwg.mxu0
    %1375 = vmatprep.subr.mxu0 0.0
    %1376 = vmatpush1.msra.mxu0 %v110
    %1377 = vmatprep.subr.mxu0 0.0
    %1378 = vmatpush1.msra.mxu0 %v107
    %1379 = vmatprep.subr.mxu0 0.0
    %1380 = vmatpush1.msra.mxu0 %v104
    %1381 = vmatprep.subr.mxu0 0.0
    %1382 = vmatpush1.msra.mxu0 %v101
    %1383 = vmatprep.subr.mxu0 0.0
    %1384 = vmatpush1.msra.mxu0 %v98
    %1385 = vmatprep.subr.mxu0 0.0
    %1386 = vmatpush1.msra.mxu0 %v95
    %1387 = vmatprep.subr.mxu0 0.0
    %1388 = vmatpush1.msra.mxu0 %v92
    %1389 = vmatprep.subr.mxu0 0.0
    %1390 = vmatpush1.msra.mxu0 %v89
    %1391 = vmatprep.subr.mxu0 0.0
    %1392 = vmatpush1.msra.mxu0 %v86
    %1393 = vmatprep.subr.mxu0 0.0
    %1394 = vmatpush1.msra.mxu0 %v83
    %1395 = vmatprep.subr.mxu0 0.0
    %1396 = vmatpush1.msra.mxu0 %v80
    %1397 = vmatprep.subr.mxu0 0.0
    %1398 = vmatpush1.msra.mxu0 %v77
    %1399 = vmatprep.subr.mxu0 0.0
    %1400 = vmatpush1.msra.mxu0 %v74
    %1401 = vmatprep.subr.mxu0 0.0
    %1402 = vmatpush1.msra.mxu0 %v71
    %1403 = vmatprep.subr.mxu0 0.0
    %1404 = vmatpush1.msra.mxu0 %v68
    %1405 = vmatprep.subr.mxu0 0.0
    %1406 = vmatpush1.msra.mxu0 %v65
    %1407 = vmatprep.subr.mxu0 0.0
    %1408 = vmatpush2.msra.mxu0 0.0
    %1409 = vmatprep.subr.mxu0 0.0
    %1410 = vmatpush2.msra.mxu0 0.0
    %1411 = vmatprep.subr.mxu0 0.0
    %1412 = vmatpush2.msra.mxu0 0.0
    %1413 = vmatprep.subr.mxu0 0.0
    %1414 = vmatpush2.msra.mxu0 0.0
    %1415 = vmatprep.subr.mxu0 0.0
    %1416 = vmatpush2.msra.mxu0 0.0
    %1417 = vmatprep.subr.mxu0 0.0
    %1418 = vmatpush2.msra.mxu0 0.0
    %1419 = vmatprep.subr.mxu0 0.0
    %1420 = vmatpush2.msra.mxu0 0.0
    %1421 = vmatprep.subr.mxu0 0.0
    %1422 = vmatpush2.msra.mxu0 0.0
    %1423 = vmatprep.subr.mxu0 0.0
    %1424 = vmatpush2.msra.mxu0 0.0
    %1425 = vmatprep.subr.mxu0 0.0
    %1426 = vmatpush2.msra.mxu0 0.0
    %1427 = vmatprep.subr.mxu0 0.0
    %1428 = vmatpush2.msra.mxu0 0.0
    %1429 = vmatprep.subr.mxu0 0.0
    %1430 = vmatpush2.msra.mxu0 0.0
    %1431 = vmatprep.subr.mxu0 0.0
    %1432 = vmatpush2.msra.mxu0 0.0
    %1433 = vmatprep.subr.mxu0 0.0
    %1434 = vmatpush2.msra.mxu0 0.0
    %1435 = vmatprep.subr.mxu0 0.0
    %1436 = vmatpush2.msra.mxu0 0.0
    %1437 = vmatprep.subr.mxu0 0.0
    %1438 = vmatpush2.msra.mxu0 0.0
    %1439 = vmatprep.mubr.f32.mxu0 0.0
    %1440 = vmatmul.mubr.f32.gmra.mxu0 %v1297
    %v1441 = vpop.f32.mrf.mxu0
    %v1442 = vadd.f32 0.0, %v1441
    %v1443 = vpop.f32.mrf.mxu0
    %1444 = vdwg.mxu0
    %v1445 = vadd.f32 %v1301, %v1371
    %v1446 = vxor.u32 %v1445, 2147483648
    %v1447 = vmul.f32 %v1446, 1.442695
    %v1448 = vpow.pop %v1447
    %v1449 = vadd.f32 %v1448, 1.0
    %v1450 = vrcp.pop %v1449
    %v1451 = vmul.f32 1.0, %v1450
    %v1452 = vadd.f32 %v1302, %v1373
    %v1453 = vxor.u32 %v1452, 2147483648
    %v1454 = vmul.f32 %v1453, 1.442695
    %v1455 = vpow.pop %v1454
    %v1456 = vadd.f32 %v1455, 1.0
    %v1457 = vrcp.pop %v1456
    %v1458 = vmul.f32 1.0, %v1457
    %v1459 = vadd.f32 %v1442, %v275
    %v1460 = vmul.f32 %v1451, %v1459
    %v1461 = vadd.f32 %v1303, %v1460
    %v1462 = vtanh.pop %v1461
    %v1463 = vsub.f32 1.0, %v1458
    %v1464 = vmul.f32 %v1463, %v1462
    %v1465 = vmul.f32 %v1458, %v1297
    %v1466 = vadd.f32 %v1464, %v1465
    %s1467 = scalar_lea.vmem [#allocation9], 56
    %1468 = vst [vmem:[%s1467] sm:$0xff] %v1466
    %1469 = vst [vmem:[#allocation2] sm:$0xff] %v1466
    // Predicated region
    $region34: #{tpu_custom_call.1} parent=1 // pred_check
      _
    $region35: #{tpu_custom_call.1} parent=1 // pred_check_branch
      %1471 = sbr.rel (0) target = $region37
    $region36: #{tpu_custom_call.1} parent=1 // pred_region
      %s1473 = ssub.s32 1024, 1024
      %1474 = vsyncadd [#allocation5], %s1473
      %s1475 = sshll.u32 [#allocation9], 4
      %s1476 = int_to_ptr.vmem [resolvable:$true] %s1475
      %1481 = dma.vmem_to_hbm [thread:$0]  %s1476, 1024, %s4, [#allocation5], 128, 128, 8
    $region37: #{tpu_custom_call.1} parent=1 // pred_fallthru
      _
    // Predicated region
    $region38: #{tpu_custom_call.1} parent=1 // pred_check
      _
    $region39: #{tpu_custom_call.1} parent=1 // pred_check_branch
      %1483 = sbr.rel (0) target = $region41
    $region40: #{tpu_custom_call.1} parent=1 // pred_region
      %1484 = dma.done [#allocation5], 1024
    $region41: #{tpu_custom_call.1} parent=1 // pred_fallthru
      _
    %1485 = vsyncpa [#allocation4], 1
    %1486 = vsyncpa [#allocation7], 1
    %1487 = vsyncpa [#allocation5], 1

</llo_original>
